<compile_context>
chip_gen: v5e
topology: v5e:2x2
jax: 0.10.0
libtpu: 0.0.40
codegen_flags: <defaults>
</compile_context>

<pallas_src>
import functools

import jax
import jax.numpy as jnp
from jax.experimental import pallas as pl
from jax.experimental.pallas import tpu as pltpu

IN_FEATURES = 28 * 28   # 784
HIDDEN = 512
OUT_FEATURES = 10
OUT_PAD = 128           # lane-dense output width (sliced back to 10 in wrapper)


def mlp_kernel(x_ref, w1_ref, b1_ref, w2_ref, b2_ref, w3_ref, b3_ref, o_ref):
    # Layer 1: (tb, 784) @ (784, 512) + (1, 512) -> ReLU   (bf16 inputs, f32 acc)
    h1 = jnp.dot(x_ref[...], w1_ref[...], preferred_element_type=jnp.float32)
    h1 = jnp.maximum(h1 + b1_ref[...], 0.0)
    # Layer 2: (tb, 512) @ (512, 512) + (1, 512) -> ReLU
    h2 = jnp.dot(h1.astype(w2_ref.dtype), w2_ref[...],
                 preferred_element_type=jnp.float32)
    h2 = jnp.maximum(h2 + b2_ref[...], 0.0)
    # Layer 3: (tb, 512) @ (512, 128) + (1, 128)   (lane-dense, padded output)
    logits = jnp.dot(h2.astype(w3_ref.dtype), w3_ref[...],
                     preferred_element_type=jnp.float32)
    o_ref[...] = (logits + b3_ref[...]).astype(o_ref.dtype)


def prepare_params(params, compute_dtype=jnp.bfloat16):
    """One-time (outside jit) prep: cast weights to bf16, pad output lanes to 128.

    PyTorch stores Linear weight as (out, in); params here are already the
    transpose (in, out) so the kernel computes x @ W + b.
    Biases stay f32 (epilogue math is f32).
    """
    w1, b1, w2, b2, w3, b3 = params
    w1p = w1.astype(compute_dtype)                                        # (784, 512)
    w2p = w2.astype(compute_dtype)                                        # (512, 512)
    w3p = jnp.pad(w3, ((0, 0), (0, OUT_PAD - OUT_FEATURES))).astype(compute_dtype)
    b1p = b1.astype(jnp.float32)
    b2p = b2.astype(jnp.float32)
    b3p = jnp.pad(b3, ((0, 0), (0, OUT_PAD - OUT_FEATURES))).astype(jnp.float32)
    return (w1p, b1p, w2p, b2p, w3p, b3p)


def _round_up(n, m):
    return ((n + m - 1) // m) * m


def _pick_block_b(batch):
    """Adaptive batch tile: minimal padding for small B, >=2 blocks for megacore
    sharding at mid-size B, larger tiles (fewer grid steps) for big B."""
    if batch <= 128:
        return max(16, _round_up(batch, 16))
    if batch <= 512:
        return 128     # guarantees >= 2 grid blocks -> both v7x TensorCores busy
    if batch <= 2048:
        return 256
    return 512         # ~a few MiB VMEM; fine on v5e/v6e/v7x scoped defaults


@functools.partial(jax.jit, static_argnames=("block_b",))
def _forward_impl(x, prepared_params, *, block_b):
    w1, b1, w2, b2, w3, b3 = prepared_params
    B = x.shape[0]

    # nn.Flatten(): (B, 1, 28, 28) -> (B, 784), row-major.
    x2d = x.reshape(B, -1)
    assert x2d.shape[1] == IN_FEATURES
    x2d = x2d.astype(w1.dtype)

    # Pad batch to a multiple of block_b (extra rows are zeros, sliced off below).
    num_blocks = pl.cdiv(B, block_b)
    b_pad = num_blocks * block_b
    if b_pad != B:
        x2d = jnp.pad(x2d, ((0, b_pad - B), (0, 0)))

    full = lambda i: (0, 0)           # constant block index: weights stay resident
    single = pl.Buffered(1)           # no double-buffering for grid-constant blocks

    out = pl.pallas_call(
        mlp_kernel,
        out_shape=jax.ShapeDtypeStruct((b_pad, OUT_PAD), jnp.bfloat16),
        grid_spec=pltpu.PrefetchScalarGridSpec(
            num_scalar_prefetch=0,
            grid=(num_blocks,),
            in_specs=[
                pl.BlockSpec((block_b, IN_FEATURES), lambda i: (i, 0)),            # x tile
                pl.BlockSpec((IN_FEATURES, HIDDEN), full, pipeline_mode=single),   # W1
                pl.BlockSpec((1, HIDDEN), full, pipeline_mode=single),             # b1
                pl.BlockSpec((HIDDEN, HIDDEN), full, pipeline_mode=single),        # W2
                pl.BlockSpec((1, HIDDEN), full, pipeline_mode=single),             # b2
                pl.BlockSpec((HIDDEN, OUT_PAD), full, pipeline_mode=single),       # W3
                pl.BlockSpec((1, OUT_PAD), full, pipeline_mode=single),            # b3
            ],
            out_specs=pl.BlockSpec((block_b, OUT_PAD), lambda i: (i, 0)),
        ),
        compiler_params=pltpu.CompilerParams(
            dimension_semantics=("parallel",),
        ),
    )(x2d, w1, b1, w2, b2, w3, b3)

    # Slice padded rows / lanes off and return f32 logits.
    return out[:B, :OUT_FEATURES].astype(jnp.float32)


def neural_network_forward(x, prepared_params):
    """x: (B, 1, 28, 28) float32 (NCHW). Returns logits (B, 10) float32."""
    block_b = _pick_block_b(x.shape[0])
    return _forward_impl(x, prepared_params, block_b=block_b)


def init_params(key):
    """Deterministic synthetic parameters matching nn.Linear shapes (transposed)."""
    k1, k2, k3, k4, k5, k6 = jax.random.split(key, 6)

    def uinit(k, shape, fan_in):
        bound = 1.0 / jnp.sqrt(fan_in)
        return jax.random.uniform(k, shape, jnp.float32, -bound, bound)

    w1 = uinit(k1, (IN_FEATURES, HIDDEN), IN_FEATURES)
    b1 = uinit(k2, (1, HIDDEN), IN_FEATURES)
    w2 = uinit(k3, (HIDDEN, HIDDEN), HIDDEN)
    b2 = uinit(k4, (1, HIDDEN), HIDDEN)
    w3 = uinit(k5, (HIDDEN, OUT_FEATURES), HIDDEN)
    b3 = uinit(k6, (1, OUT_FEATURES), HIDDEN)
    return (w1, b1, w2, b2, w3, b3)


def reference_forward(x, params):
    w1, b1, w2, b2, w3, b3 = params
    h = x.reshape(x.shape[0], -1)
    h = jnp.maximum(h @ w1 + b1, 0.0)
    h = jnp.maximum(h @ w2 + b2, 0.0)
    return h @ w3 + b3


if __name__ == "__main__":
    key = jax.random.PRNGKey(0)
    pkey, xkey = jax.random.split(key)
    params = init_params(pkey)
    prepared = prepare_params(params)          # bf16 + output-lane padding, done once

    # Small MNIST-like batch: (batch=8, channels=1, 28, 28) in NCHW.
    x = jax.random.normal(xkey, (8, 1, 28, 28), jnp.float32)

    logits = neural_network_forward(x, prepared)
    logits = jax.block_until_ready(logits)

    ref = reference_forward(x, params)
    assert logits.shape == (8, OUT_FEATURES)
    # bf16 weights/activations/output vs f32 reference -> loose but meaningful tol.
    assert jnp.allclose(logits, ref, atol=5e-2, rtol=5e-2), "mismatch vs JAX reference"

    print("KERNEL_OK")
</pallas_src>

<mosaic_0001>
module attributes {stable_mosaic.version = 11 : i64} {
  func.func @mlp_kernel(%arg0: i32, %arg1: memref<16x784xbf16, #tpu.memory_space<vmem>>, %arg2: memref<784x512xbf16, #tpu.memory_space<vmem>>, %arg3: memref<1x512xf32, #tpu.memory_space<vmem>>, %arg4: memref<512x512xbf16, #tpu.memory_space<vmem>>, %arg5: memref<1x512xf32, #tpu.memory_space<vmem>>, %arg6: memref<512x128xbf16, #tpu.memory_space<vmem>>, %arg7: memref<1x128xf32, #tpu.memory_space<vmem>>, %arg8: memref<16x128xbf16, #tpu.memory_space<vmem>>) attributes {dimension_semantics = [#tpu.dimension_semantics<parallel>], iteration_bounds = array<i64: 1>, scalar_prefetch = 0 : i64, scratch_operands = 0 : i64, tpu.core_type = #tpu.core_type<tc>, window_params = [{transform_indices = @transform_0, window_bounds = array<i64: 16, 784>}, {pipeline_mode = #tpu.pipeline_mode<synchronous>, transform_indices = @transform_1, window_bounds = array<i64: 784, 512>}, {pipeline_mode = #tpu.pipeline_mode<synchronous>, transform_indices = @transform_2, window_bounds = array<i64: 1, 512>}, {pipeline_mode = #tpu.pipeline_mode<synchronous>, transform_indices = @transform_3, window_bounds = array<i64: 512, 512>}, {pipeline_mode = #tpu.pipeline_mode<synchronous>, transform_indices = @transform_4, window_bounds = array<i64: 1, 512>}, {pipeline_mode = #tpu.pipeline_mode<synchronous>, transform_indices = @transform_5, window_bounds = array<i64: 512, 128>}, {pipeline_mode = #tpu.pipeline_mode<synchronous>, transform_indices = @transform_6, window_bounds = array<i64: 1, 128>}, {transform_indices = @transform_7, window_bounds = array<i64: 16, 128>}]} {
    %c0 = arith.constant 0 : index
    %c0_0 = arith.constant 0 : index
    %0 = vector.load %arg1[%c0, %c0_0] : memref<16x784xbf16, #tpu.memory_space<vmem>>, vector<16x784xbf16>
    %c0_1 = arith.constant 0 : index
    %c0_2 = arith.constant 0 : index
    %1 = vector.load %arg2[%c0_1, %c0_2] : memref<784x512xbf16, #tpu.memory_space<vmem>>, vector<784x512xbf16>
    %cst = arith.constant dense<0.000000e+00> : vector<16x512xf32>
    %2 = tpu.matmul %0, %1, %cst {dimension_numbers = #tpu.dot_dimension_numbers<[1], [0], [0], [1], [0, 0, 1, 1], [], []>} : vector<16x784xbf16>, vector<784x512xbf16>, vector<16x512xf32> -> vector<16x512xf32>
    %c0_3 = arith.constant 0 : index
    %c0_4 = arith.constant 0 : index
    %3 = vector.load %arg3[%c0_3, %c0_4] : memref<1x512xf32, #tpu.memory_space<vmem>>, vector<1x512xf32>
    %4 = vector.broadcast %3 : vector<1x512xf32> to vector<16x512xf32>
    %5 = arith.addf %2, %4 : vector<16x512xf32>
    %cst_5 = arith.constant 0.000000e+00 : f32
    %6 = vector.broadcast %cst_5 : f32 to vector<16x512xf32>
    %7 = arith.maximumf %5, %6 : vector<16x512xf32>
    %8 = arith.truncf %7 : vector<16x512xf32> to vector<16x512xbf16>
    %c0_6 = arith.constant 0 : index
    %c0_7 = arith.constant 0 : index
    %9 = vector.load %arg4[%c0_6, %c0_7] : memref<512x512xbf16, #tpu.memory_space<vmem>>, vector<512x512xbf16>
    %cst_8 = arith.constant dense<0.000000e+00> : vector<16x512xf32>
    %10 = tpu.matmul %8, %9, %cst_8 {dimension_numbers = #tpu.dot_dimension_numbers<[1], [0], [0], [1], [0, 0, 1, 1], [], []>} : vector<16x512xbf16>, vector<512x512xbf16>, vector<16x512xf32> -> vector<16x512xf32>
    %c0_9 = arith.constant 0 : index
    %c0_10 = arith.constant 0 : index
    %11 = vector.load %arg5[%c0_9, %c0_10] : memref<1x512xf32, #tpu.memory_space<vmem>>, vector<1x512xf32>
    %12 = vector.broadcast %11 : vector<1x512xf32> to vector<16x512xf32>
    %13 = arith.addf %10, %12 : vector<16x512xf32>
    %cst_11 = arith.constant 0.000000e+00 : f32
    %14 = vector.broadcast %cst_11 : f32 to vector<16x512xf32>
    %15 = arith.maximumf %13, %14 : vector<16x512xf32>
    %16 = arith.truncf %15 : vector<16x512xf32> to vector<16x512xbf16>
    %c0_12 = arith.constant 0 : index
    %c0_13 = arith.constant 0 : index
    %17 = vector.load %arg6[%c0_12, %c0_13] : memref<512x128xbf16, #tpu.memory_space<vmem>>, vector<512x128xbf16>
    %cst_14 = arith.constant dense<0.000000e+00> : vector<16x128xf32>
    %18 = tpu.matmul %16, %17, %cst_14 {dimension_numbers = #tpu.dot_dimension_numbers<[1], [0], [0], [1], [0, 0, 1, 1], [], []>} : vector<16x512xbf16>, vector<512x128xbf16>, vector<16x128xf32> -> vector<16x128xf32>
    %c0_15 = arith.constant 0 : index
    %c0_16 = arith.constant 0 : index
    %19 = vector.load %arg7[%c0_15, %c0_16] : memref<1x128xf32, #tpu.memory_space<vmem>>, vector<1x128xf32>
    %20 = vector.broadcast %19 : vector<1x128xf32> to vector<16x128xf32>
    %21 = arith.addf %18, %20 : vector<16x128xf32>
    %22 = arith.truncf %21 : vector<16x128xf32> to vector<16x128xbf16>
    %c0_17 = arith.constant 0 : index
    %c0_18 = arith.constant 0 : index
    %23 = vector.load %arg8[%c0_17, %c0_18] : memref<16x128xbf16, #tpu.memory_space<vmem>>, vector<16x128xbf16>
    tpu.vector_store %arg8[%c0_17, %c0_18], %22 {strides = array<i32>} : memref<16x128xbf16, #tpu.memory_space<vmem>>, vector<16x128xbf16>,
    return
  }
  func.func @transform_0(%arg0: i32) -> (i32, i32) {
    %c0_i32 = arith.constant 0 : i32
    %c0_i32_0 = arith.constant 0 : i32
    return %arg0, %c0_i32 : i32, i32
  }
  func.func @transform_1(%arg0: i32) -> (i32, i32) {
    %c0_i32 = arith.constant 0 : i32
    %c0_i32_0 = arith.constant 0 : i32
    %c0_i32_1 = arith.constant 0 : i32
    return %c0_i32, %c0_i32_0 : i32, i32
  }
  func.func @transform_2(%arg0: i32) -> (i32, i32) {
    %c0_i32 = arith.constant 0 : i32
    %c0_i32_0 = arith.constant 0 : i32
    %c0_i32_1 = arith.constant 0 : i32
    return %c0_i32, %c0_i32_0 : i32, i32
  }
  func.func @transform_3(%arg0: i32) -> (i32, i32) {
    %c0_i32 = arith.constant 0 : i32
    %c0_i32_0 = arith.constant 0 : i32
    %c0_i32_1 = arith.constant 0 : i32
    return %c0_i32, %c0_i32_0 : i32, i32
  }
  func.func @transform_4(%arg0: i32) -> (i32, i32) {
    %c0_i32 = arith.constant 0 : i32
    %c0_i32_0 = arith.constant 0 : i32
    %c0_i32_1 = arith.constant 0 : i32
    return %c0_i32, %c0_i32_0 : i32, i32
  }
  func.func @transform_5(%arg0: i32) -> (i32, i32) {
    %c0_i32 = arith.constant 0 : i32
    %c0_i32_0 = arith.constant 0 : i32
    %c0_i32_1 = arith.constant 0 : i32
    return %c0_i32, %c0_i32_0 : i32, i32
  }
  func.func @transform_6(%arg0: i32) -> (i32, i32) {
    %c0_i32 = arith.constant 0 : i32
    %c0_i32_0 = arith.constant 0 : i32
    %c0_i32_1 = arith.constant 0 : i32
    return %c0_i32, %c0_i32_0 : i32, i32
  }
  func.func @transform_7(%arg0: i32) -> (i32, i32) {
    %c0_i32 = arith.constant 0 : i32
    %c0_i32_0 = arith.constant 0 : i32
    return %arg0, %c0_i32 : i32, i32
  }
}

</mosaic_0001>

<llo_original>
// kernel: _forward_impl.1
$region0: #{_forward_impl.1}
  #allocation0 [shape = 'u32[]', space=smem, size = 0x4, offset = 0x4, fixed_abs, tag = 'smem constant byte address 0x4 - core index']
  #allocation1 [shape = 'u32[72,128]{1,0:T(1,128)}', space=vmem, size = 0x9000, scoped, tag = 'internal scratch']
  %s0 = inlined_call_operand.vmem [shape: bf16[16,784], index: 0, kind: input, shape index: {}]
  %s1 = inlined_call_operand.hbm [shape: bf16[784,512], index: 1, kind: input, shape index: {}]
  %s2 = inlined_call_operand.vmem [shape: f32[1,512], index: 2, kind: input, shape index: {}]
  %s3 = inlined_call_operand.hbm [shape: bf16[512,512], index: 3, kind: input, shape index: {}]
  %s4 = inlined_call_operand.vmem [shape: f32[1,512], index: 4, kind: input, shape index: {}]
  %s5 = inlined_call_operand.vmem [shape: bf16[512,128], index: 5, kind: input, shape index: {}]
  %s6 = inlined_call_operand.vmem [shape: f32[1,128], index: 6, kind: input, shape index: {}]
  %s7 = inlined_call_operand.vmem [shape: bf16[16,128], index: 7, kind: output, shape index: {}]
  %s8 = sld [smem:[#allocation0]]
  $region46: #{_forward_impl.1} parent=0
    _
  %s10 = ssub.s32 1, %s8
  %s11 = scalar_select 0, %s10, %s8
  $region1: #{_forward_impl.1} parent=0
    #allocation2 [shape = 'u8[802816]{0}', space=vmem, size = 0xc4000, scoped, tag = 'input window, operand 1, single buffered']
    #allocation3 [shape = 's32[1]{0}', space=sflag, size = 0x4, scoped, tag = 'scoped memory for _forward_impl.1']
    #allocation4 [shape = 'u8[524288]{0}', space=vmem, size = 0x80000, scoped, tag = 'input window, operand 3, single buffered']
    #allocation5 [shape = 's32[1]{0}', space=sflag, size = 0x4, scoped, tag = 'scoped memory for _forward_impl.1']
    %12 = vsyncpa [#allocation3], 0
    %13 = vsyncpa [#allocation5], 0
    // Predicated region
    $region2: #{_forward_impl.1} parent=1 // pred_check
      _
    $region3: #{_forward_impl.1} parent=1 // pred_check_branch
      %15 = sbr.rel (0) target = $region5
    $region4: #{_forward_impl.1} parent=1 // pred_region
      _
    $region5: #{_forward_impl.1} parent=1 // pred_fallthru
      _
    // Predicated region
    $region6: #{_forward_impl.1} parent=1 // pred_check
      _
    $region7: #{_forward_impl.1} parent=1 // pred_check_branch
      %17 = sbr.rel (0) target = $region9
    $region8: #{_forward_impl.1} parent=1 // pred_region
      %19 = vsyncadd [#allocation3], 0
      %s20 = sshll.u32 %s1, 4
      %s21 = int_to_ptr.hbm [resolvable:$true] %s20
      %s22 = sshll.u32 [#allocation2], 4
      %s23 = int_to_ptr.vmem [resolvable:$true] %s22
      %28 = dma.hbm_to_vmem [thread:$0]  %s21, 25088, %s23, [#allocation3], 256, 256, 16
    $region9: #{_forward_impl.1} parent=1 // pred_fallthru
      _
    // Predicated region
    $region10: #{_forward_impl.1} parent=1 // pred_check
      _
    $region11: #{_forward_impl.1} parent=1 // pred_check_branch
      %30 = sbr.rel (0) target = $region13
    $region12: #{_forward_impl.1} parent=1 // pred_region
      _
    $region13: #{_forward_impl.1} parent=1 // pred_fallthru
      _
    // Predicated region
    $region14: #{_forward_impl.1} parent=1 // pred_check
      _
    $region15: #{_forward_impl.1} parent=1 // pred_check_branch
      %32 = sbr.rel (0) target = $region17
    $region16: #{_forward_impl.1} parent=1 // pred_region
      %34 = vsyncadd [#allocation5], 0
      %s35 = sshll.u32 %s3, 4
      %s36 = int_to_ptr.hbm [resolvable:$true] %s35
      %s37 = sshll.u32 [#allocation4], 4
      %s38 = int_to_ptr.vmem [resolvable:$true] %s37
      %43 = dma.hbm_to_vmem [thread:$0]  %s36, 16384, %s38, [#allocation5], 256, 256, 16
    $region17: #{_forward_impl.1} parent=1 // pred_fallthru
      _
    // Predicated region
    $region18: #{_forward_impl.1} parent=1 // pred_check
      _
    $region19: #{_forward_impl.1} parent=1 // pred_check_branch
      %45 = sbr.rel (0) target = $region21
    $region20: #{_forward_impl.1} parent=1 // pred_region
      _
    $region21: #{_forward_impl.1} parent=1 // pred_fallthru
      _
    // Predicated region
    $region22: #{_forward_impl.1} parent=1 // pred_check
      _
    $region23: #{_forward_impl.1} parent=1 // pred_check_branch
      %47 = sbr.rel (0) target = $region25
    $region24: #{_forward_impl.1} parent=1 // pred_region
      _
    $region25: #{_forward_impl.1} parent=1 // pred_fallthru
      _
    // Predicated region
    $region26: #{_forward_impl.1} parent=1 // pred_check
      _
    $region27: #{_forward_impl.1} parent=1 // pred_check_branch
      %49 = sbr.rel (0) target = $region29
    $region28: #{_forward_impl.1} parent=1 // pred_region
      _
    $region29: #{_forward_impl.1} parent=1 // pred_fallthru
      _
    // Predicated region
    $region30: #{_forward_impl.1} parent=1 // pred_check
      _
    $region31: #{_forward_impl.1} parent=1 // pred_check_branch
      %51 = sbr.rel (0) target = $region33
    $region32: #{_forward_impl.1} parent=1 // pred_region
      %53 = dma.done [#allocation3], 25088
    $region33: #{_forward_impl.1} parent=1 // pred_fallthru
      _
    // Predicated region
    $region34: #{_forward_impl.1} parent=1 // pred_check
      _
    $region35: #{_forward_impl.1} parent=1 // pred_check_branch
      %55 = sbr.rel (0) target = $region37
    $region36: #{_forward_impl.1} parent=1 // pred_region
      %57 = dma.done [#allocation5], 16384
    $region37: #{_forward_impl.1} parent=1 // pred_fallthru
      _
    %v59 = vld [vmem:[%s0] sm:$0xff]
    %v60 = vld [vmem:[%s0 + $0x8] sm:$0xff]
    %v61 = vld [vmem:[%s0 + $0x10] sm:$0xff]
    %v62 = vld [vmem:[%s0 + $0x18] sm:$0xf]
    %v63 = vld [vmem:[%s0 + $0x1c] sm:$0xff]
    %v64 = vld [vmem:[%s0 + $0x24] sm:$0xff]
    %v65 = vld [vmem:[%s0 + $0x2c] sm:$0xff]
    %v66 = vld [vmem:[%s0 + $0x34] sm:$0xf]
    %v67 = vld [vmem:[#allocation2] sm:$0xff]
    %v68 = vld [vmem:[#allocation2 + $0x8] sm:$0xff]
    %v69 = vld [vmem:[#allocation2 + $0x10] sm:$0xff]
    %v70 = vld [vmem:[#allocation2 + $0x18] sm:$0xff]
    %v71 = vld [vmem:[#allocation2 + $0x20] sm:$0xff]
    %v72 = vld [vmem:[#allocation2 + $0x28] sm:$0xff]
    %v73 = vld [vmem:[#allocation2 + $0x30] sm:$0xff]
    %v74 = vld [vmem:[#allocation2 + $0x38] sm:$0xff]
    %v75 = vld [vmem:[#allocation2 + $0x40] sm:$0xff]
    %v76 = vld [vmem:[#allocation2 + $0x48] sm:$0xff]
    %v77 = vld [vmem:[#allocation2 + $0x50] sm:$0xff]
    %v78 = vld [vmem:[#allocation2 + $0x58] sm:$0xff]
    %v79 = vld [vmem:[#allocation2 + $0x60] sm:$0xff]
    %v80 = vld [vmem:[#allocation2 + $0x68] sm:$0xff]
    %v81 = vld [vmem:[#allocation2 + $0x70] sm:$0xff]
    %v82 = vld [vmem:[#allocation2 + $0x78] sm:$0xff]
    %v83 = vld [vmem:[#allocation2 + $0x80] sm:$0xff]
    %v84 = vld [vmem:[#allocation2 + $0x88] sm:$0xff]
    %v85 = vld [vmem:[#allocation2 + $0x90] sm:$0xff]
    %v86 = vld [vmem:[#allocation2 + $0x98] sm:$0xff]
    %v87 = vld [vmem:[#allocation2 + $0xa0] sm:$0xff]
    %v88 = vld [vmem:[#allocation2 + $0xa8] sm:$0xff]
    %v89 = vld [vmem:[#allocation2 + $0xb0] sm:$0xff]
    %v90 = vld [vmem:[#allocation2 + $0xb8] sm:$0xff]
    %v91 = vld [vmem:[#allocation2 + $0xc0] sm:$0xff]
    %v92 = vld [vmem:[#allocation2 + $0xc8] sm:$0xff]
    %v93 = vld [vmem:[#allocation2 + $0xd0] sm:$0xff]
    %v94 = vld [vmem:[#allocation2 + $0xd8] sm:$0xff]
    %v95 = vld [vmem:[#allocation2 + $0xe0] sm:$0xff]
    %v96 = vld [vmem:[#allocation2 + $0xe8] sm:$0xff]
    %v97 = vld [vmem:[#allocation2 + $0xf0] sm:$0xff]
    %v98 = vld [vmem:[#allocation2 + $0xf8] sm:$0xff]
    %v99 = vld [vmem:[#allocation2 + $0x100] sm:$0xff]
    %v100 = vld [vmem:[#allocation2 + $0x108] sm:$0xff]
    %v101 = vld [vmem:[#allocation2 + $0x110] sm:$0xff]
    %v102 = vld [vmem:[#allocation2 + $0x118] sm:$0xff]
    %v103 = vld [vmem:[#allocation2 + $0x120] sm:$0xff]
    %v104 = vld [vmem:[#allocation2 + $0x128] sm:$0xff]
    %v105 = vld [vmem:[#allocation2 + $0x130] sm:$0xff]
    %v106 = vld [vmem:[#allocation2 + $0x138] sm:$0xff]
    %v107 = vld [vmem:[#allocation2 + $0x140] sm:$0xff]
    %v108 = vld [vmem:[#allocation2 + $0x148] sm:$0xff]
    %v109 = vld [vmem:[#allocation2 + $0x150] sm:$0xff]
    %v110 = vld [vmem:[#allocation2 + $0x158] sm:$0xff]
    %v111 = vld [vmem:[#allocation2 + $0x160] sm:$0xff]
    %v112 = vld [vmem:[#allocation2 + $0x168] sm:$0xff]
    %v113 = vld [vmem:[#allocation2 + $0x170] sm:$0xff]
    %v114 = vld [vmem:[#allocation2 + $0x178] sm:$0xff]
    %v115 = vld [vmem:[#allocation2 + $0x180] sm:$0xff]
    %v116 = vld [vmem:[#allocation2 + $0x188] sm:$0xff]
    %v117 = vld [vmem:[#allocation2 + $0x190] sm:$0xff]
    %v118 = vld [vmem:[#allocation2 + $0x198] sm:$0xff]
    %v119 = vld [vmem:[#allocation2 + $0x1a0] sm:$0xff]
    %v120 = vld [vmem:[#allocation2 + $0x1a8] sm:$0xff]
    %v121 = vld [vmem:[#allocation2 + $0x1b0] sm:$0xff]
    %v122 = vld [vmem:[#allocation2 + $0x1b8] sm:$0xff]
    %v123 = vld [vmem:[#allocation2 + $0x1c0] sm:$0xff]
    %v124 = vld [vmem:[#allocation2 + $0x1c8] sm:$0xff]
    %v125 = vld [vmem:[#allocation2 + $0x1d0] sm:$0xff]
    %v126 = vld [vmem:[#allocation2 + $0x1d8] sm:$0xff]
    %v127 = vld [vmem:[#allocation2 + $0x1e0] sm:$0xff]
    %v128 = vld [vmem:[#allocation2 + $0x1e8] sm:$0xff]
    %v129 = vld [vmem:[#allocation2 + $0x1f0] sm:$0xff]
    %v130 = vld [vmem:[#allocation2 + $0x1f8] sm:$0xff]
    %v131 = vld [vmem:[#allocation2 + $0x200] sm:$0xff]
    %v132 = vld [vmem:[#allocation2 + $0x208] sm:$0xff]
    %v133 = vld [vmem:[#allocation2 + $0x210] sm:$0xff]
    %v134 = vld [vmem:[#allocation2 + $0x218] sm:$0xff]
    %v135 = vld [vmem:[#allocation2 + $0x220] sm:$0xff]
    %v136 = vld [vmem:[#allocation2 + $0x228] sm:$0xff]
    %v137 = vld [vmem:[#allocation2 + $0x230] sm:$0xff]
    %v138 = vld [vmem:[#allocation2 + $0x238] sm:$0xff]
    %v139 = vld [vmem:[#allocation2 + $0x240] sm:$0xff]
    %v140 = vld [vmem:[#allocation2 + $0x248] sm:$0xff]
    %v141 = vld [vmem:[#allocation2 + $0x250] sm:$0xff]
    %v142 = vld [vmem:[#allocation2 + $0x258] sm:$0xff]
    %v143 = vld [vmem:[#allocation2 + $0x260] sm:$0xff]
    %v144 = vld [vmem:[#allocation2 + $0x268] sm:$0xff]
    %v145 = vld [vmem:[#allocation2 + $0x270] sm:$0xff]
    %v146 = vld [vmem:[#allocation2 + $0x278] sm:$0xff]
    %v147 = vld [vmem:[#allocation2 + $0x280] sm:$0xff]
    %v148 = vld [vmem:[#allocation2 + $0x288] sm:$0xff]
    %v149 = vld [vmem:[#allocation2 + $0x290] sm:$0xff]
    %v150 = vld [vmem:[#allocation2 + $0x298] sm:$0xff]
    %v151 = vld [vmem:[#allocation2 + $0x2a0] sm:$0xff]
    %v152 = vld [vmem:[#allocation2 + $0x2a8] sm:$0xff]
    %v153 = vld [vmem:[#allocation2 + $0x2b0] sm:$0xff]
    %v154 = vld [vmem:[#allocation2 + $0x2b8] sm:$0xff]
    %v155 = vld [vmem:[#allocation2 + $0x2c0] sm:$0xff]
    %v156 = vld [vmem:[#allocation2 + $0x2c8] sm:$0xff]
    %v157 = vld [vmem:[#allocation2 + $0x2d0] sm:$0xff]
    %v158 = vld [vmem:[#allocation2 + $0x2d8] sm:$0xff]
    %v159 = vld [vmem:[#allocation2 + $0x2e0] sm:$0xff]
    %v160 = vld [vmem:[#allocation2 + $0x2e8] sm:$0xff]
    %v161 = vld [vmem:[#allocation2 + $0x2f0] sm:$0xff]
    %v162 = vld [vmem:[#allocation2 + $0x2f8] sm:$0xff]
    %v163 = vld [vmem:[#allocation2 + $0x300] sm:$0xff]
    %v164 = vld [vmem:[#allocation2 + $0x308] sm:$0xff]
    %v165 = vld [vmem:[#allocation2 + $0x310] sm:$0xff]
    %v166 = vld [vmem:[#allocation2 + $0x318] sm:$0xff]
    %v167 = vld [vmem:[#allocation2 + $0x320] sm:$0xff]
    %v168 = vld [vmem:[#allocation2 + $0x328] sm:$0xff]
    %v169 = vld [vmem:[#allocation2 + $0x330] sm:$0xff]
    %v170 = vld [vmem:[#allocation2 + $0x338] sm:$0xff]
    %v171 = vld [vmem:[#allocation2 + $0x340] sm:$0xff]
    %v172 = vld [vmem:[#allocation2 + $0x348] sm:$0xff]
    %v173 = vld [vmem:[#allocation2 + $0x350] sm:$0xff]
    %v174 = vld [vmem:[#allocation2 + $0x358] sm:$0xff]
    %v175 = vld [vmem:[#allocation2 + $0x360] sm:$0xff]
    %v176 = vld [vmem:[#allocation2 + $0x368] sm:$0xff]
    %v177 = vld [vmem:[#allocation2 + $0x370] sm:$0xff]
    %v178 = vld [vmem:[#allocation2 + $0x378] sm:$0xff]
    %v179 = vld [vmem:[#allocation2 + $0x380] sm:$0xff]
    %v180 = vld [vmem:[#allocation2 + $0x388] sm:$0xff]
    %v181 = vld [vmem:[#allocation2 + $0x390] sm:$0xff]
    %v182 = vld [vmem:[#allocation2 + $0x398] sm:$0xff]
    %v183 = vld [vmem:[#allocation2 + $0x3a0] sm:$0xff]
    %v184 = vld [vmem:[#allocation2 + $0x3a8] sm:$0xff]
    %v185 = vld [vmem:[#allocation2 + $0x3b0] sm:$0xff]
    %v186 = vld [vmem:[#allocation2 + $0x3b8] sm:$0xff]
    %v187 = vld [vmem:[#allocation2 + $0x3c0] sm:$0xff]
    %v188 = vld [vmem:[#allocation2 + $0x3c8] sm:$0xff]
    %v189 = vld [vmem:[#allocation2 + $0x3d0] sm:$0xff]
    %v190 = vld [vmem:[#allocation2 + $0x3d8] sm:$0xff]
    %v191 = vld [vmem:[#allocation2 + $0x3e0] sm:$0xff]
    %v192 = vld [vmem:[#allocation2 + $0x3e8] sm:$0xff]
    %v193 = vld [vmem:[#allocation2 + $0x3f0] sm:$0xff]
    %v194 = vld [vmem:[#allocation2 + $0x3f8] sm:$0xff]
    %v195 = vld [vmem:[#allocation2 + $0x400] sm:$0xff]
    %v196 = vld [vmem:[#allocation2 + $0x408] sm:$0xff]
    %v197 = vld [vmem:[#allocation2 + $0x410] sm:$0xff]
    %v198 = vld [vmem:[#allocation2 + $0x418] sm:$0xff]
    %v199 = vld [vmem:[#allocation2 + $0x420] sm:$0xff]
    %v200 = vld [vmem:[#allocation2 + $0x428] sm:$0xff]
    %v201 = vld [vmem:[#allocation2 + $0x430] sm:$0xff]
    %v202 = vld [vmem:[#allocation2 + $0x438] sm:$0xff]
    %v203 = vld [vmem:[#allocation2 + $0x440] sm:$0xff]
    %v204 = vld [vmem:[#allocation2 + $0x448] sm:$0xff]
    %v205 = vld [vmem:[#allocation2 + $0x450] sm:$0xff]
    %v206 = vld [vmem:[#allocation2 + $0x458] sm:$0xff]
    %v207 = vld [vmem:[#allocation2 + $0x460] sm:$0xff]
    %v208 = vld [vmem:[#allocation2 + $0x468] sm:$0xff]
    %v209 = vld [vmem:[#allocation2 + $0x470] sm:$0xff]
    %v210 = vld [vmem:[#allocation2 + $0x478] sm:$0xff]
    %v211 = vld [vmem:[#allocation2 + $0x480] sm:$0xff]
    %v212 = vld [vmem:[#allocation2 + $0x488] sm:$0xff]
    %v213 = vld [vmem:[#allocation2 + $0x490] sm:$0xff]
    %v214 = vld [vmem:[#allocation2 + $0x498] sm:$0xff]
    %v215 = vld [vmem:[#allocation2 + $0x4a0] sm:$0xff]
    %v216 = vld [vmem:[#allocation2 + $0x4a8] sm:$0xff]
    %v217 = vld [vmem:[#allocation2 + $0x4b0] sm:$0xff]
    %v218 = vld [vmem:[#allocation2 + $0x4b8] sm:$0xff]
    %v219 = vld [vmem:[#allocation2 + $0x4c0] sm:$0xff]
    %v220 = vld [vmem:[#allocation2 + $0x4c8] sm:$0xff]
    %v221 = vld [vmem:[#allocation2 + $0x4d0] sm:$0xff]
    %v222 = vld [vmem:[#allocation2 + $0x4d8] sm:$0xff]
    %v223 = vld [vmem:[#allocation2 + $0x4e0] sm:$0xff]
    %v224 = vld [vmem:[#allocation2 + $0x4e8] sm:$0xff]
    %v225 = vld [vmem:[#allocation2 + $0x4f0] sm:$0xff]
    %v226 = vld [vmem:[#allocation2 + $0x4f8] sm:$0xff]
    %v227 = vld [vmem:[#allocation2 + $0x500] sm:$0xff]
    %v228 = vld [vmem:[#allocation2 + $0x508] sm:$0xff]
    %v229 = vld [vmem:[#allocation2 + $0x510] sm:$0xff]
    %v230 = vld [vmem:[#allocation2 + $0x518] sm:$0xff]
    %v231 = vld [vmem:[#allocation2 + $0x520] sm:$0xff]
    %v232 = vld [vmem:[#allocation2 + $0x528] sm:$0xff]
    %v233 = vld [vmem:[#allocation2 + $0x530] sm:$0xff]
    %v234 = vld [vmem:[#allocation2 + $0x538] sm:$0xff]
    %v235 = vld [vmem:[#allocation2 + $0x540] sm:$0xff]
    %v236 = vld [vmem:[#allocation2 + $0x548] sm:$0xff]
    %v237 = vld [vmem:[#allocation2 + $0x550] sm:$0xff]
    %v238 = vld [vmem:[#allocation2 + $0x558] sm:$0xff]
    %v239 = vld [vmem:[#allocation2 + $0x560] sm:$0xff]
    %v240 = vld [vmem:[#allocation2 + $0x568] sm:$0xff]
    %v241 = vld [vmem:[#allocation2 + $0x570] sm:$0xff]
    %v242 = vld [vmem:[#allocation2 + $0x578] sm:$0xff]
    %v243 = vld [vmem:[#allocation2 + $0x580] sm:$0xff]
    %v244 = vld [vmem:[#allocation2 + $0x588] sm:$0xff]
    %v245 = vld [vmem:[#allocation2 + $0x590] sm:$0xff]
    %v246 = vld [vmem:[#allocation2 + $0x598] sm:$0xff]
    %v247 = vld [vmem:[#allocation2 + $0x5a0] sm:$0xff]
    %v248 = vld [vmem:[#allocation2 + $0x5a8] sm:$0xff]
    %v249 = vld [vmem:[#allocation2 + $0x5b0] sm:$0xff]
    %v250 = vld [vmem:[#allocation2 + $0x5b8] sm:$0xff]
    %v251 = vld [vmem:[#allocation2 + $0x5c0] sm:$0xff]
    %v252 = vld [vmem:[#allocation2 + $0x5c8] sm:$0xff]
    %v253 = vld [vmem:[#allocation2 + $0x5d0] sm:$0xff]
    %v254 = vld [vmem:[#allocation2 + $0x5d8] sm:$0xff]
    %v255 = vld [vmem:[#allocation2 + $0x5e0] sm:$0xff]
    %v256 = vld [vmem:[#allocation2 + $0x5e8] sm:$0xff]
    %v257 = vld [vmem:[#allocation2 + $0x5f0] sm:$0xff]
    %v258 = vld [vmem:[#allocation2 + $0x5f8] sm:$0xff]
    %v259 = vld [vmem:[#allocation2 + $0x600] sm:$0xff]
    %v260 = vld [vmem:[#allocation2 + $0x608] sm:$0xff]
    %v261 = vld [vmem:[#allocation2 + $0x610] sm:$0xff]
    %v262 = vld [vmem:[#allocation2 + $0x618] sm:$0xff]
    %v263 = vld [vmem:[%s2] sm:$0xf]
    %v265 = vperm.slane %v263, 0
    %v266 = vperm.slane %v263, 1
    %v267 = vperm.slane %v263, 2
    %v268 = vperm.slane %v263, 3
    %v281 = vunpack.c.l.b16 %v59
    %v282 = vunpack.c.h.b16 %v59
    %v283 = vunpack.c.l.b16 %v60
    %v284 = vunpack.c.h.b16 %v60
    %v285 = vunpack.c.l.b16 %v61
    %v286 = vunpack.c.h.b16 %v61
    %v287 = vunpack.c.l.b16 %v62
    %v288 = vunpack.c.l.b16 %v63
    %v289 = vunpack.c.h.b16 %v63
    %v290 = vunpack.c.l.b16 %v64
    %v291 = vunpack.c.h.b16 %v64
    %v292 = vunpack.c.l.b16 %v65
    %v293 = vunpack.c.h.b16 %v65
    %v294 = vunpack.c.l.b16 %v66
    %v295 = vpack.c.b16 %v288, %v281
    %v296 = vpack.c.b16 %v289, %v282
    %v297 = vpack.c.b16 %v290, %v283
    %v298 = vpack.c.b16 %v291, %v284
    %v299 = vpack.c.b16 %v292, %v285
    %v300 = vpack.c.b16 %v293, %v286
    %v301 = vpack.c.b16 %v294, %v287
    %v504 = vunpack.c.l.b16 %v67
    %v505 = vunpack.c.h.b16 %v67
    %v506 = vunpack.c.l.b16 %v68
    %v507 = vunpack.c.h.b16 %v68
    %v508 = vunpack.c.l.b16 %v69
    %v509 = vunpack.c.h.b16 %v69
    %v510 = vunpack.c.l.b16 %v70
    %v511 = vunpack.c.h.b16 %v70
    %v512 = vunpack.c.l.b16 %v71
    %v513 = vunpack.c.h.b16 %v71
    %v514 = vunpack.c.l.b16 %v72
    %v515 = vunpack.c.h.b16 %v72
    %v516 = vunpack.c.l.b16 %v73
    %v517 = vunpack.c.h.b16 %v73
    %v518 = vunpack.c.l.b16 %v74
    %v519 = vunpack.c.h.b16 %v74
    %v520 = vunpack.c.l.b16 %v75
    %v521 = vunpack.c.h.b16 %v75
    %v522 = vunpack.c.l.b16 %v76
    %v523 = vunpack.c.h.b16 %v76
    %v524 = vunpack.c.l.b16 %v77
    %v525 = vunpack.c.h.b16 %v77
    %v526 = vunpack.c.l.b16 %v78
    %v527 = vunpack.c.h.b16 %v78
    %v528 = vunpack.c.l.b16 %v79
    %v529 = vunpack.c.h.b16 %v79
    %v530 = vunpack.c.l.b16 %v80
    %v531 = vunpack.c.h.b16 %v80
    %v532 = vunpack.c.l.b16 %v81
    %v533 = vunpack.c.h.b16 %v81
    %v534 = vunpack.c.l.b16 %v82
    %v535 = vunpack.c.h.b16 %v82
    %v536 = vunpack.c.l.b16 %v83
    %v537 = vunpack.c.h.b16 %v83
    %v538 = vunpack.c.l.b16 %v84
    %v539 = vunpack.c.h.b16 %v84
    %v540 = vunpack.c.l.b16 %v85
    %v541 = vunpack.c.h.b16 %v85
    %v542 = vunpack.c.l.b16 %v86
    %v543 = vunpack.c.h.b16 %v86
    %v544 = vunpack.c.l.b16 %v87
    %v545 = vunpack.c.h.b16 %v87
    %v546 = vunpack.c.l.b16 %v88
    %v547 = vunpack.c.h.b16 %v88
    %v548 = vunpack.c.l.b16 %v89
    %v549 = vunpack.c.h.b16 %v89
    %v550 = vunpack.c.l.b16 %v90
    %v551 = vunpack.c.h.b16 %v90
    %v552 = vunpack.c.l.b16 %v91
    %v553 = vunpack.c.h.b16 %v91
    %v554 = vunpack.c.l.b16 %v92
    %v555 = vunpack.c.h.b16 %v92
    %v556 = vunpack.c.l.b16 %v93
    %v557 = vunpack.c.h.b16 %v93
    %v558 = vunpack.c.l.b16 %v94
    %v559 = vunpack.c.h.b16 %v94
    %v560 = vunpack.c.l.b16 %v95
    %v561 = vunpack.c.h.b16 %v95
    %v562 = vunpack.c.l.b16 %v96
    %v563 = vunpack.c.h.b16 %v96
    %v564 = vunpack.c.l.b16 %v97
    %v565 = vunpack.c.h.b16 %v97
    %v566 = vunpack.c.l.b16 %v98
    %v567 = vunpack.c.h.b16 %v98
    %v568 = vunpack.c.l.b16 %v99
    %v569 = vunpack.c.h.b16 %v99
    %v570 = vunpack.c.l.b16 %v100
    %v571 = vunpack.c.h.b16 %v100
    %v572 = vunpack.c.l.b16 %v101
    %v573 = vunpack.c.h.b16 %v101
    %v574 = vunpack.c.l.b16 %v102
    %v575 = vunpack.c.h.b16 %v102
    %v576 = vunpack.c.l.b16 %v103
    %v577 = vunpack.c.h.b16 %v103
    %v578 = vunpack.c.l.b16 %v104
    %v579 = vunpack.c.h.b16 %v104
    %v580 = vunpack.c.l.b16 %v105
    %v581 = vunpack.c.h.b16 %v105
    %v582 = vunpack.c.l.b16 %v106
    %v583 = vunpack.c.h.b16 %v106
    %v584 = vunpack.c.l.b16 %v107
    %v585 = vunpack.c.h.b16 %v107
    %v586 = vunpack.c.l.b16 %v108
    %v587 = vunpack.c.h.b16 %v108
    %v588 = vunpack.c.l.b16 %v109
    %v589 = vunpack.c.h.b16 %v109
    %v590 = vunpack.c.l.b16 %v110
    %v591 = vunpack.c.h.b16 %v110
    %v592 = vunpack.c.l.b16 %v111
    %v593 = vunpack.c.h.b16 %v111
    %v594 = vunpack.c.l.b16 %v112
    %v595 = vunpack.c.h.b16 %v112
    %v596 = vunpack.c.l.b16 %v113
    %v597 = vunpack.c.h.b16 %v113
    %v598 = vunpack.c.l.b16 %v114
    %v599 = vunpack.c.h.b16 %v114
    %v600 = vunpack.c.l.b16 %v115
    %v601 = vunpack.c.h.b16 %v115
    %v602 = vunpack.c.l.b16 %v116
    %v603 = vunpack.c.h.b16 %v116
    %v604 = vunpack.c.l.b16 %v117
    %v605 = vunpack.c.h.b16 %v117
    %v606 = vunpack.c.l.b16 %v118
    %v607 = vunpack.c.h.b16 %v118
    %v608 = vunpack.c.l.b16 %v119
    %v609 = vunpack.c.h.b16 %v119
    %v610 = vunpack.c.l.b16 %v120
    %v611 = vunpack.c.h.b16 %v120
    %v612 = vunpack.c.l.b16 %v121
    %v613 = vunpack.c.h.b16 %v121
    %v614 = vunpack.c.l.b16 %v122
    %v615 = vunpack.c.h.b16 %v122
    %v616 = vunpack.c.l.b16 %v123
    %v617 = vunpack.c.h.b16 %v123
    %v618 = vunpack.c.l.b16 %v124
    %v619 = vunpack.c.h.b16 %v124
    %v620 = vunpack.c.l.b16 %v125
    %v621 = vunpack.c.h.b16 %v125
    %v622 = vunpack.c.l.b16 %v126
    %v623 = vunpack.c.h.b16 %v126
    %v624 = vunpack.c.l.b16 %v127
    %v625 = vunpack.c.h.b16 %v127
    %v626 = vunpack.c.l.b16 %v128
    %v627 = vunpack.c.h.b16 %v128
    %v628 = vunpack.c.l.b16 %v129
    %v629 = vunpack.c.h.b16 %v129
    %v630 = vunpack.c.l.b16 %v130
    %v631 = vunpack.c.h.b16 %v130
    %v632 = vunpack.c.l.b16 %v131
    %v633 = vunpack.c.h.b16 %v131
    %v634 = vunpack.c.l.b16 %v132
    %v635 = vunpack.c.h.b16 %v132
    %v636 = vunpack.c.l.b16 %v133
    %v637 = vunpack.c.h.b16 %v133
    %v638 = vunpack.c.l.b16 %v134
    %v639 = vunpack.c.h.b16 %v134
    %v640 = vunpack.c.l.b16 %v135
    %v641 = vunpack.c.h.b16 %v135
    %v642 = vunpack.c.l.b16 %v136
    %v643 = vunpack.c.h.b16 %v136
    %v644 = vunpack.c.l.b16 %v137
    %v645 = vunpack.c.h.b16 %v137
    %v646 = vunpack.c.l.b16 %v138
    %v647 = vunpack.c.h.b16 %v138
    %v648 = vunpack.c.l.b16 %v139
    %v649 = vunpack.c.h.b16 %v139
    %v650 = vunpack.c.l.b16 %v140
    %v651 = vunpack.c.h.b16 %v140
    %v652 = vunpack.c.l.b16 %v141
    %v653 = vunpack.c.h.b16 %v141
    %v654 = vunpack.c.l.b16 %v142
    %v655 = vunpack.c.h.b16 %v142
    %v656 = vunpack.c.l.b16 %v143
    %v657 = vunpack.c.h.b16 %v143
    %v658 = vunpack.c.l.b16 %v144
    %v659 = vunpack.c.h.b16 %v144
    %v660 = vunpack.c.l.b16 %v145
    %v661 = vunpack.c.h.b16 %v145
    %v662 = vunpack.c.l.b16 %v146
    %v663 = vunpack.c.h.b16 %v146
    %v664 = vunpack.c.l.b16 %v147
    %v665 = vunpack.c.h.b16 %v147
    %v666 = vunpack.c.l.b16 %v148
    %v667 = vunpack.c.h.b16 %v148
    %v668 = vunpack.c.l.b16 %v149
    %v669 = vunpack.c.h.b16 %v149
    %v670 = vunpack.c.l.b16 %v150
    %v671 = vunpack.c.h.b16 %v150
    %v672 = vunpack.c.l.b16 %v151
    %v673 = vunpack.c.h.b16 %v151
    %v674 = vunpack.c.l.b16 %v152
    %v675 = vunpack.c.h.b16 %v152
    %v676 = vunpack.c.l.b16 %v153
    %v677 = vunpack.c.h.b16 %v153
    %v678 = vunpack.c.l.b16 %v154
    %v679 = vunpack.c.h.b16 %v154
    %v680 = vunpack.c.l.b16 %v155
    %v681 = vunpack.c.h.b16 %v155
    %v682 = vunpack.c.l.b16 %v156
    %v683 = vunpack.c.h.b16 %v156
    %v684 = vunpack.c.l.b16 %v157
    %v685 = vunpack.c.h.b16 %v157
    %v686 = vunpack.c.l.b16 %v158
    %v687 = vunpack.c.h.b16 %v158
    %v688 = vunpack.c.l.b16 %v159
    %v689 = vunpack.c.h.b16 %v159
    %v690 = vunpack.c.l.b16 %v160
    %v691 = vunpack.c.h.b16 %v160
    %v692 = vunpack.c.l.b16 %v161
    %v693 = vunpack.c.h.b16 %v161
    %v694 = vunpack.c.l.b16 %v162
    %v695 = vunpack.c.h.b16 %v162
    %v696 = vunpack.c.l.b16 %v163
    %v697 = vunpack.c.h.b16 %v163
    %v698 = vunpack.c.l.b16 %v164
    %v699 = vunpack.c.h.b16 %v164
    %v700 = vunpack.c.l.b16 %v165
    %v701 = vunpack.c.h.b16 %v165
    %v702 = vunpack.c.l.b16 %v166
    %v703 = vunpack.c.h.b16 %v166
    %v704 = vunpack.c.l.b16 %v167
    %v705 = vunpack.c.h.b16 %v167
    %v706 = vunpack.c.l.b16 %v168
    %v707 = vunpack.c.h.b16 %v168
    %v708 = vunpack.c.l.b16 %v169
    %v709 = vunpack.c.h.b16 %v169
    %v710 = vunpack.c.l.b16 %v170
    %v711 = vunpack.c.h.b16 %v170
    %v712 = vunpack.c.l.b16 %v171
    %v713 = vunpack.c.h.b16 %v171
    %v714 = vunpack.c.l.b16 %v172
    %v715 = vunpack.c.h.b16 %v172
    %v716 = vunpack.c.l.b16 %v173
    %v717 = vunpack.c.h.b16 %v173
    %v718 = vunpack.c.l.b16 %v174
    %v719 = vunpack.c.h.b16 %v174
    %v720 = vunpack.c.l.b16 %v175
    %v721 = vunpack.c.h.b16 %v175
    %v722 = vunpack.c.l.b16 %v176
    %v723 = vunpack.c.h.b16 %v176
    %v724 = vunpack.c.l.b16 %v177
    %v725 = vunpack.c.h.b16 %v177
    %v726 = vunpack.c.l.b16 %v178
    %v727 = vunpack.c.h.b16 %v178
    %v728 = vunpack.c.l.b16 %v179
    %v729 = vunpack.c.h.b16 %v179
    %v730 = vunpack.c.l.b16 %v180
    %v731 = vunpack.c.h.b16 %v180
    %v732 = vunpack.c.l.b16 %v181
    %v733 = vunpack.c.h.b16 %v181
    %v734 = vunpack.c.l.b16 %v182
    %v735 = vunpack.c.h.b16 %v182
    %v736 = vunpack.c.l.b16 %v183
    %v737 = vunpack.c.h.b16 %v183
    %v738 = vunpack.c.l.b16 %v184
    %v739 = vunpack.c.h.b16 %v184
    %v740 = vunpack.c.l.b16 %v185
    %v741 = vunpack.c.h.b16 %v185
    %v742 = vunpack.c.l.b16 %v186
    %v743 = vunpack.c.h.b16 %v186
    %v744 = vunpack.c.l.b16 %v187
    %v745 = vunpack.c.h.b16 %v187
    %v746 = vunpack.c.l.b16 %v188
    %v747 = vunpack.c.h.b16 %v188
    %v748 = vunpack.c.l.b16 %v189
    %v749 = vunpack.c.h.b16 %v189
    %v750 = vunpack.c.l.b16 %v190
    %v751 = vunpack.c.h.b16 %v190
    %v752 = vunpack.c.l.b16 %v191
    %v753 = vunpack.c.h.b16 %v191
    %v754 = vunpack.c.l.b16 %v192
    %v755 = vunpack.c.h.b16 %v192
    %v756 = vunpack.c.l.b16 %v193
    %v757 = vunpack.c.h.b16 %v193
    %v758 = vunpack.c.l.b16 %v194
    %v759 = vunpack.c.h.b16 %v194
    %v760 = vunpack.c.l.b16 %v195
    %v761 = vunpack.c.h.b16 %v195
    %v762 = vunpack.c.l.b16 %v196
    %v763 = vunpack.c.h.b16 %v196
    %v764 = vunpack.c.l.b16 %v197
    %v765 = vunpack.c.h.b16 %v197
    %v766 = vunpack.c.l.b16 %v198
    %v767 = vunpack.c.h.b16 %v198
    %v768 = vunpack.c.l.b16 %v199
    %v769 = vunpack.c.h.b16 %v199
    %v770 = vunpack.c.l.b16 %v200
    %v771 = vunpack.c.h.b16 %v200
    %v772 = vunpack.c.l.b16 %v201
    %v773 = vunpack.c.h.b16 %v201
    %v774 = vunpack.c.l.b16 %v202
    %v775 = vunpack.c.h.b16 %v202
    %v776 = vunpack.c.l.b16 %v203
    %v777 = vunpack.c.h.b16 %v203
    %v778 = vunpack.c.l.b16 %v204
    %v779 = vunpack.c.h.b16 %v204
    %v780 = vunpack.c.l.b16 %v205
    %v781 = vunpack.c.h.b16 %v205
    %v782 = vunpack.c.l.b16 %v206
    %v783 = vunpack.c.h.b16 %v206
    %v784 = vunpack.c.l.b16 %v207
    %v785 = vunpack.c.h.b16 %v207
    %v786 = vunpack.c.l.b16 %v208
    %v787 = vunpack.c.h.b16 %v208
    %v788 = vunpack.c.l.b16 %v209
    %v789 = vunpack.c.h.b16 %v209
    %v790 = vunpack.c.l.b16 %v210
    %v791 = vunpack.c.h.b16 %v210
    %v792 = vunpack.c.l.b16 %v211
    %v793 = vunpack.c.h.b16 %v211
    %v794 = vunpack.c.l.b16 %v212
    %v795 = vunpack.c.h.b16 %v212
    %v796 = vunpack.c.l.b16 %v213
    %v797 = vunpack.c.h.b16 %v213
    %v798 = vunpack.c.l.b16 %v214
    %v799 = vunpack.c.h.b16 %v214
    %v800 = vunpack.c.l.b16 %v215
    %v801 = vunpack.c.h.b16 %v215
    %v802 = vunpack.c.l.b16 %v216
    %v803 = vunpack.c.h.b16 %v216
    %v804 = vunpack.c.l.b16 %v217
    %v805 = vunpack.c.h.b16 %v217
    %v806 = vunpack.c.l.b16 %v218
    %v807 = vunpack.c.h.b16 %v218
    %v808 = vunpack.c.l.b16 %v219
    %v809 = vunpack.c.h.b16 %v219
    %v810 = vunpack.c.l.b16 %v220
    %v811 = vunpack.c.h.b16 %v220
    %v812 = vunpack.c.l.b16 %v221
    %v813 = vunpack.c.h.b16 %v221
    %v814 = vunpack.c.l.b16 %v222
    %v815 = vunpack.c.h.b16 %v222
    %v816 = vunpack.c.l.b16 %v223
    %v817 = vunpack.c.h.b16 %v223
    %v818 = vunpack.c.l.b16 %v224
    %v819 = vunpack.c.h.b16 %v224
    %v820 = vunpack.c.l.b16 %v225
    %v821 = vunpack.c.h.b16 %v225
    %v822 = vunpack.c.l.b16 %v226
    %v823 = vunpack.c.h.b16 %v226
    %v824 = vunpack.c.l.b16 %v227
    %v825 = vunpack.c.h.b16 %v227
    %v826 = vunpack.c.l.b16 %v228
    %v827 = vunpack.c.h.b16 %v228
    %v828 = vunpack.c.l.b16 %v229
    %v829 = vunpack.c.h.b16 %v229
    %v830 = vunpack.c.l.b16 %v230
    %v831 = vunpack.c.h.b16 %v230
    %v832 = vunpack.c.l.b16 %v231
    %v833 = vunpack.c.h.b16 %v231
    %v834 = vunpack.c.l.b16 %v232
    %v835 = vunpack.c.h.b16 %v232
    %v836 = vunpack.c.l.b16 %v233
    %v837 = vunpack.c.h.b16 %v233
    %v838 = vunpack.c.l.b16 %v234
    %v839 = vunpack.c.h.b16 %v234
    %v840 = vunpack.c.l.b16 %v235
    %v841 = vunpack.c.h.b16 %v235
    %v842 = vunpack.c.l.b16 %v236
    %v843 = vunpack.c.h.b16 %v236
    %v844 = vunpack.c.l.b16 %v237
    %v845 = vunpack.c.h.b16 %v237
    %v846 = vunpack.c.l.b16 %v238
    %v847 = vunpack.c.h.b16 %v238
    %v848 = vunpack.c.l.b16 %v239
    %v849 = vunpack.c.h.b16 %v239
    %v850 = vunpack.c.l.b16 %v240
    %v851 = vunpack.c.h.b16 %v240
    %v852 = vunpack.c.l.b16 %v241
    %v853 = vunpack.c.h.b16 %v241
    %v854 = vunpack.c.l.b16 %v242
    %v855 = vunpack.c.h.b16 %v242
    %v856 = vunpack.c.l.b16 %v243
    %v857 = vunpack.c.h.b16 %v243
    %v858 = vunpack.c.l.b16 %v244
    %v859 = vunpack.c.h.b16 %v244
    %v860 = vunpack.c.l.b16 %v245
    %v861 = vunpack.c.h.b16 %v245
    %v862 = vunpack.c.l.b16 %v246
    %v863 = vunpack.c.h.b16 %v246
    %v864 = vunpack.c.l.b16 %v247
    %v865 = vunpack.c.h.b16 %v247
    %v866 = vunpack.c.l.b16 %v248
    %v867 = vunpack.c.h.b16 %v248
    %v868 = vunpack.c.l.b16 %v249
    %v869 = vunpack.c.h.b16 %v249
    %v870 = vunpack.c.l.b16 %v250
    %v871 = vunpack.c.h.b16 %v250
    %v872 = vunpack.c.l.b16 %v251
    %v873 = vunpack.c.h.b16 %v251
    %v874 = vunpack.c.l.b16 %v252
    %v875 = vunpack.c.h.b16 %v252
    %v876 = vunpack.c.l.b16 %v253
    %v877 = vunpack.c.h.b16 %v253
    %v878 = vunpack.c.l.b16 %v254
    %v879 = vunpack.c.h.b16 %v254
    %v880 = vunpack.c.l.b16 %v255
    %v881 = vunpack.c.h.b16 %v255
    %v882 = vunpack.c.l.b16 %v256
    %v883 = vunpack.c.h.b16 %v256
    %v884 = vunpack.c.l.b16 %v257
    %v885 = vunpack.c.h.b16 %v257
    %v886 = vunpack.c.l.b16 %v258
    %v887 = vunpack.c.h.b16 %v258
    %v888 = vunpack.c.l.b16 %v259
    %v889 = vunpack.c.h.b16 %v259
    %v890 = vunpack.c.l.b16 %v260
    %v891 = vunpack.c.h.b16 %v260
    %v892 = vunpack.c.l.b16 %v261
    %v893 = vunpack.c.h.b16 %v261
    %v894 = vunpack.c.l.b16 %v262
    %v895 = vunpack.c.h.b16 %v262
    %v896 = vpack.c.b16 %v508, %v504
    %v897 = vpack.c.b16 %v509, %v505
    %v898 = vpack.c.b16 %v510, %v506
    %v899 = vpack.c.b16 %v511, %v507
    %v900 = vpack.c.b16 %v516, %v512
    %v901 = vpack.c.b16 %v517, %v513
    %v902 = vpack.c.b16 %v518, %v514
    %v903 = vpack.c.b16 %v519, %v515
    %v904 = vpack.c.b16 %v524, %v520
    %v905 = vpack.c.b16 %v525, %v521
    %v906 = vpack.c.b16 %v526, %v522
    %v907 = vpack.c.b16 %v527, %v523
    %v908 = vpack.c.b16 %v532, %v528
    %v909 = vpack.c.b16 %v533, %v529
    %v910 = vpack.c.b16 %v534, %v530
    %v911 = vpack.c.b16 %v535, %v531
    %v912 = vpack.c.b16 %v540, %v536
    %v913 = vpack.c.b16 %v541, %v537
    %v914 = vpack.c.b16 %v542, %v538
    %v915 = vpack.c.b16 %v543, %v539
    %v916 = vpack.c.b16 %v548, %v544
    %v917 = vpack.c.b16 %v549, %v545
    %v918 = vpack.c.b16 %v550, %v546
    %v919 = vpack.c.b16 %v551, %v547
    %v920 = vpack.c.b16 %v556, %v552
    %v921 = vpack.c.b16 %v557, %v553
    %v922 = vpack.c.b16 %v558, %v554
    %v923 = vpack.c.b16 %v559, %v555
    %v924 = vpack.c.b16 %v564, %v560
    %v925 = vpack.c.b16 %v565, %v561
    %v926 = vpack.c.b16 %v566, %v562
    %v927 = vpack.c.b16 %v567, %v563
    %v928 = vpack.c.b16 %v572, %v568
    %v929 = vpack.c.b16 %v573, %v569
    %v930 = vpack.c.b16 %v574, %v570
    %v931 = vpack.c.b16 %v575, %v571
    %v932 = vpack.c.b16 %v580, %v576
    %v933 = vpack.c.b16 %v581, %v577
    %v934 = vpack.c.b16 %v582, %v578
    %v935 = vpack.c.b16 %v583, %v579
    %v936 = vpack.c.b16 %v588, %v584
    %v937 = vpack.c.b16 %v589, %v585
    %v938 = vpack.c.b16 %v590, %v586
    %v939 = vpack.c.b16 %v591, %v587
    %v940 = vpack.c.b16 %v596, %v592
    %v941 = vpack.c.b16 %v597, %v593
    %v942 = vpack.c.b16 %v598, %v594
    %v943 = vpack.c.b16 %v599, %v595
    %v944 = vpack.c.b16 %v604, %v600
    %v945 = vpack.c.b16 %v605, %v601
    %v946 = vpack.c.b16 %v606, %v602
    %v947 = vpack.c.b16 %v607, %v603
    %v948 = vpack.c.b16 %v612, %v608
    %v949 = vpack.c.b16 %v613, %v609
    %v950 = vpack.c.b16 %v614, %v610
    %v951 = vpack.c.b16 %v615, %v611
    %v952 = vpack.c.b16 %v620, %v616
    %v953 = vpack.c.b16 %v621, %v617
    %v954 = vpack.c.b16 %v622, %v618
    %v955 = vpack.c.b16 %v623, %v619
    %v956 = vpack.c.b16 %v628, %v624
    %v957 = vpack.c.b16 %v629, %v625
    %v958 = vpack.c.b16 %v630, %v626
    %v959 = vpack.c.b16 %v631, %v627
    %v960 = vpack.c.b16 %v636, %v632
    %v961 = vpack.c.b16 %v637, %v633
    %v962 = vpack.c.b16 %v638, %v634
    %v963 = vpack.c.b16 %v639, %v635
    %v964 = vpack.c.b16 %v644, %v640
    %v965 = vpack.c.b16 %v645, %v641
    %v966 = vpack.c.b16 %v646, %v642
    %v967 = vpack.c.b16 %v647, %v643
    %v968 = vpack.c.b16 %v652, %v648
    %v969 = vpack.c.b16 %v653, %v649
    %v970 = vpack.c.b16 %v654, %v650
    %v971 = vpack.c.b16 %v655, %v651
    %v972 = vpack.c.b16 %v660, %v656
    %v973 = vpack.c.b16 %v661, %v657
    %v974 = vpack.c.b16 %v662, %v658
    %v975 = vpack.c.b16 %v663, %v659
    %v976 = vpack.c.b16 %v668, %v664
    %v977 = vpack.c.b16 %v669, %v665
    %v978 = vpack.c.b16 %v670, %v666
    %v979 = vpack.c.b16 %v671, %v667
    %v980 = vpack.c.b16 %v676, %v672
    %v981 = vpack.c.b16 %v677, %v673
    %v982 = vpack.c.b16 %v678, %v674
    %v983 = vpack.c.b16 %v679, %v675
    %v984 = vpack.c.b16 %v684, %v680
    %v985 = vpack.c.b16 %v685, %v681
    %v986 = vpack.c.b16 %v686, %v682
    %v987 = vpack.c.b16 %v687, %v683
    %v988 = vpack.c.b16 %v692, %v688
    %v989 = vpack.c.b16 %v693, %v689
    %v990 = vpack.c.b16 %v694, %v690
    %v991 = vpack.c.b16 %v695, %v691
    %v992 = vpack.c.b16 %v700, %v696
    %v993 = vpack.c.b16 %v701, %v697
    %v994 = vpack.c.b16 %v702, %v698
    %v995 = vpack.c.b16 %v703, %v699
    %v996 = vpack.c.b16 %v708, %v704
    %v997 = vpack.c.b16 %v709, %v705
    %v998 = vpack.c.b16 %v710, %v706
    %v999 = vpack.c.b16 %v711, %v707
    %v1000 = vpack.c.b16 %v716, %v712
    %v1001 = vpack.c.b16 %v717, %v713
    %v1002 = vpack.c.b16 %v718, %v714
    %v1003 = vpack.c.b16 %v719, %v715
    %v1004 = vpack.c.b16 %v724, %v720
    %v1005 = vpack.c.b16 %v725, %v721
    %v1006 = vpack.c.b16 %v726, %v722
    %v1007 = vpack.c.b16 %v727, %v723
    %v1008 = vpack.c.b16 %v732, %v728
    %v1009 = vpack.c.b16 %v733, %v729
    %v1010 = vpack.c.b16 %v734, %v730
    %v1011 = vpack.c.b16 %v735, %v731
    %v1012 = vpack.c.b16 %v740, %v736
    %v1013 = vpack.c.b16 %v741, %v737
    %v1014 = vpack.c.b16 %v742, %v738
    %v1015 = vpack.c.b16 %v743, %v739
    %v1016 = vpack.c.b16 %v748, %v744
    %v1017 = vpack.c.b16 %v749, %v745
    %v1018 = vpack.c.b16 %v750, %v746
    %v1019 = vpack.c.b16 %v751, %v747
    %v1020 = vpack.c.b16 %v756, %v752
    %v1021 = vpack.c.b16 %v757, %v753
    %v1022 = vpack.c.b16 %v758, %v754
    %v1023 = vpack.c.b16 %v759, %v755
    %v1024 = vpack.c.b16 %v764, %v760
    %v1025 = vpack.c.b16 %v765, %v761
    %v1026 = vpack.c.b16 %v766, %v762
    %v1027 = vpack.c.b16 %v767, %v763
    %v1028 = vpack.c.b16 %v772, %v768
    %v1029 = vpack.c.b16 %v773, %v769
    %v1030 = vpack.c.b16 %v774, %v770
    %v1031 = vpack.c.b16 %v775, %v771
    %v1032 = vpack.c.b16 %v780, %v776
    %v1033 = vpack.c.b16 %v781, %v777
    %v1034 = vpack.c.b16 %v782, %v778
    %v1035 = vpack.c.b16 %v783, %v779
    %v1036 = vpack.c.b16 %v788, %v784
    %v1037 = vpack.c.b16 %v789, %v785
    %v1038 = vpack.c.b16 %v790, %v786
    %v1039 = vpack.c.b16 %v791, %v787
    %v1040 = vpack.c.b16 %v796, %v792
    %v1041 = vpack.c.b16 %v797, %v793
    %v1042 = vpack.c.b16 %v798, %v794
    %v1043 = vpack.c.b16 %v799, %v795
    %v1044 = vpack.c.b16 %v804, %v800
    %v1045 = vpack.c.b16 %v805, %v801
    %v1046 = vpack.c.b16 %v806, %v802
    %v1047 = vpack.c.b16 %v807, %v803
    %v1048 = vpack.c.b16 %v812, %v808
    %v1049 = vpack.c.b16 %v813, %v809
    %v1050 = vpack.c.b16 %v814, %v810
    %v1051 = vpack.c.b16 %v815, %v811
    %v1052 = vpack.c.b16 %v820, %v816
    %v1053 = vpack.c.b16 %v821, %v817
    %v1054 = vpack.c.b16 %v822, %v818
    %v1055 = vpack.c.b16 %v823, %v819
    %v1056 = vpack.c.b16 %v828, %v824
    %v1057 = vpack.c.b16 %v829, %v825
    %v1058 = vpack.c.b16 %v830, %v826
    %v1059 = vpack.c.b16 %v831, %v827
    %v1060 = vpack.c.b16 %v836, %v832
    %v1061 = vpack.c.b16 %v837, %v833
    %v1062 = vpack.c.b16 %v838, %v834
    %v1063 = vpack.c.b16 %v839, %v835
    %v1064 = vpack.c.b16 %v844, %v840
    %v1065 = vpack.c.b16 %v845, %v841
    %v1066 = vpack.c.b16 %v846, %v842
    %v1067 = vpack.c.b16 %v847, %v843
    %v1068 = vpack.c.b16 %v852, %v848
    %v1069 = vpack.c.b16 %v853, %v849
    %v1070 = vpack.c.b16 %v854, %v850
    %v1071 = vpack.c.b16 %v855, %v851
    %v1072 = vpack.c.b16 %v860, %v856
    %v1073 = vpack.c.b16 %v861, %v857
    %v1074 = vpack.c.b16 %v862, %v858
    %v1075 = vpack.c.b16 %v863, %v859
    %v1076 = vpack.c.b16 %v868, %v864
    %v1077 = vpack.c.b16 %v869, %v865
    %v1078 = vpack.c.b16 %v870, %v866
    %v1079 = vpack.c.b16 %v871, %v867
    %v1080 = vpack.c.b16 %v876, %v872
    %v1081 = vpack.c.b16 %v877, %v873
    %v1082 = vpack.c.b16 %v878, %v874
    %v1083 = vpack.c.b16 %v879, %v875
    %v1084 = vpack.c.b16 %v884, %v880
    %v1085 = vpack.c.b16 %v885, %v881
    %v1086 = vpack.c.b16 %v886, %v882
    %v1087 = vpack.c.b16 %v887, %v883
    %v1088 = vpack.c.b16 %v892, %v888
    %v1089 = vpack.c.b16 %v893, %v889
    %v1090 = vpack.c.b16 %v894, %v890
    %v1091 = vpack.c.b16 %v895, %v891
    %vm1288 = vcmask 130048
    %v1290 = vsel %vm1288, %v301, 0
    %1292 = vmatpush.bf16.msra.mxu0 %v924
    %1293 = vmatpush.bf16.msra.mxu0 %v920
    %1294 = vmatpush.bf16.msra.mxu0 %v916
    %1295 = vmatpush.bf16.msra.mxu0 %v912
    %1296 = vmatpush.bf16.msra.mxu0 %v908
    %1297 = vmatpush.bf16.msra.mxu0 %v904
    %1298 = vmatpush.bf16.msra.mxu0 %v900
    %1299 = vmatpush.bf16.msra.mxu0 %v896
    %1300 = vmatmul.bf16.gmra.mxu0 %v295
    %v1301 = vpop.f32.mrf.mxu0
    %v1302 = vadd.f32 %v265, %v1301
    %v1303 = vpop.f32.mrf.mxu0
    %v1304 = vadd.f32 %v265, %v1303
    %1305 = vdwg.mxu0
    %1306 = vmatpush.bf16.msra.mxu0 %v956
    %1307 = vmatpush.bf16.msra.mxu0 %v952
    %1308 = vmatpush.bf16.msra.mxu0 %v948
    %1309 = vmatpush.bf16.msra.mxu0 %v944
    %1310 = vmatpush.bf16.msra.mxu0 %v940
    %1311 = vmatpush.bf16.msra.mxu0 %v936
    %1312 = vmatpush.bf16.msra.mxu0 %v932
    %1313 = vmatpush.bf16.msra.mxu0 %v928
    %1314 = vmatmul.bf16.gmra.mxu0 %v296
    %v1315 = vpop.f32.mrf.mxu0
    %v1316 = vadd.f32 %v1302, %v1315
    %v1317 = vpop.f32.mrf.mxu0
    %v1318 = vadd.f32 %v1304, %v1317
    %1319 = vdwg.mxu0
    %1320 = vmatpush.bf16.msra.mxu0 %v988
    %1321 = vmatpush.bf16.msra.mxu0 %v984
    %1322 = vmatpush.bf16.msra.mxu0 %v980
    %1323 = vmatpush.bf16.msra.mxu0 %v976
    %1324 = vmatpush.bf16.msra.mxu0 %v972
    %1325 = vmatpush.bf16.msra.mxu0 %v968
    %1326 = vmatpush.bf16.msra.mxu0 %v964
    %1327 = vmatpush.bf16.msra.mxu0 %v960
    %1328 = vmatmul.bf16.gmra.mxu0 %v297
    %v1329 = vpop.f32.mrf.mxu0
    %v1330 = vadd.f32 %v1316, %v1329
    %v1331 = vpop.f32.mrf.mxu0
    %v1332 = vadd.f32 %v1318, %v1331
    %1333 = vdwg.mxu0
    %1334 = vmatpush.bf16.msra.mxu0 %v1020
    %1335 = vmatpush.bf16.msra.mxu0 %v1016
    %1336 = vmatpush.bf16.msra.mxu0 %v1012
    %1337 = vmatpush.bf16.msra.mxu0 %v1008
    %1338 = vmatpush.bf16.msra.mxu0 %v1004
    %1339 = vmatpush.bf16.msra.mxu0 %v1000
    %1340 = vmatpush.bf16.msra.mxu0 %v996
    %1341 = vmatpush.bf16.msra.mxu0 %v992
    %1342 = vmatmul.bf16.gmra.mxu0 %v298
    %v1343 = vpop.f32.mrf.mxu0
    %v1344 = vadd.f32 %v1330, %v1343
    %v1345 = vpop.f32.mrf.mxu0
    %v1346 = vadd.f32 %v1332, %v1345
    %1347 = vdwg.mxu0
    %1348 = vmatpush.bf16.msra.mxu0 %v1052
    %1349 = vmatpush.bf16.msra.mxu0 %v1048
    %1350 = vmatpush.bf16.msra.mxu0 %v1044
    %1351 = vmatpush.bf16.msra.mxu0 %v1040
    %1352 = vmatpush.bf16.msra.mxu0 %v1036
    %1353 = vmatpush.bf16.msra.mxu0 %v1032
    %1354 = vmatpush.bf16.msra.mxu0 %v1028
    %1355 = vmatpush.bf16.msra.mxu0 %v1024
    %1356 = vmatmul.bf16.gmra.mxu0 %v299
    %v1357 = vpop.f32.mrf.mxu0
    %v1358 = vadd.f32 %v1344, %v1357
    %v1359 = vpop.f32.mrf.mxu0
    %v1360 = vadd.f32 %v1346, %v1359
    %1361 = vdwg.mxu0
    %1362 = vmatpush.bf16.msra.mxu0 %v1084
    %1363 = vmatpush.bf16.msra.mxu0 %v1080
    %1364 = vmatpush.bf16.msra.mxu0 %v1076
    %1365 = vmatpush.bf16.msra.mxu0 %v1072
    %1366 = vmatpush.bf16.msra.mxu0 %v1068
    %1367 = vmatpush.bf16.msra.mxu0 %v1064
    %1368 = vmatpush.bf16.msra.mxu0 %v1060
    %1369 = vmatpush.bf16.msra.mxu0 %v1056
    %1370 = vmatmul.bf16.gmra.mxu0 %v300
    %v1371 = vpop.f32.mrf.mxu0
    %v1372 = vadd.f32 %v1358, %v1371
    %v1373 = vpop.f32.mrf.mxu0
    %v1374 = vadd.f32 %v1360, %v1373
    %1375 = vdwg.mxu0
    %1376 = vmatpush.bf16.msra.mxu0 0
    %1377 = vmatpush.bf16.msra.mxu0 0
    %1378 = vmatpush.bf16.msra.mxu0 0
    %1379 = vmatpush.bf16.msra.mxu0 0
    %1380 = vmatpush.bf16.msra.mxu0 0
    %1381 = vmatpush.bf16.msra.mxu0 0
    %1382 = vmatpush.bf16.msra.mxu0 0
    %1383 = vmatpush.bf16.msra.mxu0 %v1088
    %1384 = vmatmul.bf16.gmra.mxu0 %v1290
    %v1385 = vpop.f32.mrf.mxu0
    %v1386 = vadd.f32 %v1372, %v1385
    %v1387 = vpop.f32.mrf.mxu0
    %v1388 = vadd.f32 %v1374, %v1387
    %1389 = vdwg.mxu0
    %1390 = vmatpush.bf16.msra.mxu0 %v925
    %1391 = vmatpush.bf16.msra.mxu0 %v921
    %1392 = vmatpush.bf16.msra.mxu0 %v917
    %1393 = vmatpush.bf16.msra.mxu0 %v913
    %1394 = vmatpush.bf16.msra.mxu0 %v909
    %1395 = vmatpush.bf16.msra.mxu0 %v905
    %1396 = vmatpush.bf16.msra.mxu0 %v901
    %1397 = vmatpush.bf16.msra.mxu0 %v897
    %1398 = vmatmul.bf16.gmra.mxu0 %v295
    %v1399 = vpop.f32.mrf.mxu0
    %v1400 = vadd.f32 %v266, %v1399
    %v1401 = vpop.f32.mrf.mxu0
    %v1402 = vadd.f32 %v266, %v1401
    %1403 = vdwg.mxu0
    %1404 = vmatpush.bf16.msra.mxu0 %v957
    %1405 = vmatpush.bf16.msra.mxu0 %v953
    %1406 = vmatpush.bf16.msra.mxu0 %v949
    %1407 = vmatpush.bf16.msra.mxu0 %v945
    %1408 = vmatpush.bf16.msra.mxu0 %v941
    %1409 = vmatpush.bf16.msra.mxu0 %v937
    %1410 = vmatpush.bf16.msra.mxu0 %v933
    %1411 = vmatpush.bf16.msra.mxu0 %v929
    %1412 = vmatmul.bf16.gmra.mxu0 %v296
    %v1413 = vpop.f32.mrf.mxu0
    %v1414 = vadd.f32 %v1400, %v1413
    %v1415 = vpop.f32.mrf.mxu0
    %v1416 = vadd.f32 %v1402, %v1415
    %1417 = vdwg.mxu0
    %1418 = vmatpush.bf16.msra.mxu0 %v989
    %1419 = vmatpush.bf16.msra.mxu0 %v985
    %1420 = vmatpush.bf16.msra.mxu0 %v981
    %1421 = vmatpush.bf16.msra.mxu0 %v977
    %1422 = vmatpush.bf16.msra.mxu0 %v973
    %1423 = vmatpush.bf16.msra.mxu0 %v969
    %1424 = vmatpush.bf16.msra.mxu0 %v965
    %1425 = vmatpush.bf16.msra.mxu0 %v961
    %1426 = vmatmul.bf16.gmra.mxu0 %v297
    %v1427 = vpop.f32.mrf.mxu0
    %v1428 = vadd.f32 %v1414, %v1427
    %v1429 = vpop.f32.mrf.mxu0
    %v1430 = vadd.f32 %v1416, %v1429
    %1431 = vdwg.mxu0
    %1432 = vmatpush.bf16.msra.mxu0 %v1021
    %1433 = vmatpush.bf16.msra.mxu0 %v1017
    %1434 = vmatpush.bf16.msra.mxu0 %v1013
    %1435 = vmatpush.bf16.msra.mxu0 %v1009
    %1436 = vmatpush.bf16.msra.mxu0 %v1005
    %1437 = vmatpush.bf16.msra.mxu0 %v1001
    %1438 = vmatpush.bf16.msra.mxu0 %v997
    %1439 = vmatpush.bf16.msra.mxu0 %v993
    %1440 = vmatmul.bf16.gmra.mxu0 %v298
    %v1441 = vpop.f32.mrf.mxu0
    %v1442 = vadd.f32 %v1428, %v1441
    %v1443 = vpop.f32.mrf.mxu0
    %v1444 = vadd.f32 %v1430, %v1443
    %1445 = vdwg.mxu0
    %1446 = vmatpush.bf16.msra.mxu0 %v1053
    %1447 = vmatpush.bf16.msra.mxu0 %v1049
    %1448 = vmatpush.bf16.msra.mxu0 %v1045
    %1449 = vmatpush.bf16.msra.mxu0 %v1041
    %1450 = vmatpush.bf16.msra.mxu0 %v1037
    %1451 = vmatpush.bf16.msra.mxu0 %v1033
    %1452 = vmatpush.bf16.msra.mxu0 %v1029
    %1453 = vmatpush.bf16.msra.mxu0 %v1025
    %1454 = vmatmul.bf16.gmra.mxu0 %v299
    %v1455 = vpop.f32.mrf.mxu0
    %v1456 = vadd.f32 %v1442, %v1455
    %v1457 = vpop.f32.mrf.mxu0
    %v1458 = vadd.f32 %v1444, %v1457
    %1459 = vdwg.mxu0
    %1460 = vmatpush.bf16.msra.mxu0 %v1085
    %1461 = vmatpush.bf16.msra.mxu0 %v1081
    %1462 = vmatpush.bf16.msra.mxu0 %v1077
    %1463 = vmatpush.bf16.msra.mxu0 %v1073
    %1464 = vmatpush.bf16.msra.mxu0 %v1069
    %1465 = vmatpush.bf16.msra.mxu0 %v1065
    %1466 = vmatpush.bf16.msra.mxu0 %v1061
    %1467 = vmatpush.bf16.msra.mxu0 %v1057
    %1468 = vmatmul.bf16.gmra.mxu0 %v300
    %v1469 = vpop.f32.mrf.mxu0
    %v1470 = vadd.f32 %v1456, %v1469
    %v1471 = vpop.f32.mrf.mxu0
    %v1472 = vadd.f32 %v1458, %v1471
    %1473 = vdwg.mxu0
    %1474 = vmatpush.bf16.msra.mxu0 0
    %1475 = vmatpush.bf16.msra.mxu0 0
    %1476 = vmatpush.bf16.msra.mxu0 0
    %1477 = vmatpush.bf16.msra.mxu0 0
    %1478 = vmatpush.bf16.msra.mxu0 0
    %1479 = vmatpush.bf16.msra.mxu0 0
    %1480 = vmatpush.bf16.msra.mxu0 0
    %1481 = vmatpush.bf16.msra.mxu0 %v1089
    %1482 = vmatmul.bf16.gmra.mxu0 %v1290
    %v1483 = vpop.f32.mrf.mxu0
    %v1484 = vadd.f32 %v1470, %v1483
    %v1485 = vpop.f32.mrf.mxu0
    %v1486 = vadd.f32 %v1472, %v1485
    %1487 = vdwg.mxu0
    %1488 = vmatpush.bf16.msra.mxu0 %v926
    %1489 = vmatpush.bf16.msra.mxu0 %v922
    %1490 = vmatpush.bf16.msra.mxu0 %v918
    %1491 = vmatpush.bf16.msra.mxu0 %v914
    %1492 = vmatpush.bf16.msra.mxu0 %v910
    %1493 = vmatpush.bf16.msra.mxu0 %v906
    %1494 = vmatpush.bf16.msra.mxu0 %v902
    %1495 = vmatpush.bf16.msra.mxu0 %v898
    %1496 = vmatmul.bf16.gmra.mxu0 %v295
    %v1497 = vpop.f32.mrf.mxu0
    %v1498 = vadd.f32 %v267, %v1497
    %v1499 = vpop.f32.mrf.mxu0
    %v1500 = vadd.f32 %v267, %v1499
    %1501 = vdwg.mxu0
    %1502 = vmatpush.bf16.msra.mxu0 %v958
    %1503 = vmatpush.bf16.msra.mxu0 %v954
    %1504 = vmatpush.bf16.msra.mxu0 %v950
    %1505 = vmatpush.bf16.msra.mxu0 %v946
    %1506 = vmatpush.bf16.msra.mxu0 %v942
    %1507 = vmatpush.bf16.msra.mxu0 %v938
    %1508 = vmatpush.bf16.msra.mxu0 %v934
    %1509 = vmatpush.bf16.msra.mxu0 %v930
    %1510 = vmatmul.bf16.gmra.mxu0 %v296
    %v1511 = vpop.f32.mrf.mxu0
    %v1512 = vadd.f32 %v1498, %v1511
    %v1513 = vpop.f32.mrf.mxu0
    %v1514 = vadd.f32 %v1500, %v1513
    %1515 = vdwg.mxu0
    %1516 = vmatpush.bf16.msra.mxu0 %v990
    %1517 = vmatpush.bf16.msra.mxu0 %v986
    %1518 = vmatpush.bf16.msra.mxu0 %v982
    %1519 = vmatpush.bf16.msra.mxu0 %v978
    %1520 = vmatpush.bf16.msra.mxu0 %v974
    %1521 = vmatpush.bf16.msra.mxu0 %v970
    %1522 = vmatpush.bf16.msra.mxu0 %v966
    %1523 = vmatpush.bf16.msra.mxu0 %v962
    %1524 = vmatmul.bf16.gmra.mxu0 %v297
    %v1525 = vpop.f32.mrf.mxu0
    %v1526 = vadd.f32 %v1512, %v1525
    %v1527 = vpop.f32.mrf.mxu0
    %v1528 = vadd.f32 %v1514, %v1527
    %1529 = vdwg.mxu0
    %1530 = vmatpush.bf16.msra.mxu0 %v1022
    %1531 = vmatpush.bf16.msra.mxu0 %v1018
    %1532 = vmatpush.bf16.msra.mxu0 %v1014
    %1533 = vmatpush.bf16.msra.mxu0 %v1010
    %1534 = vmatpush.bf16.msra.mxu0 %v1006
    %1535 = vmatpush.bf16.msra.mxu0 %v1002
    %1536 = vmatpush.bf16.msra.mxu0 %v998
    %1537 = vmatpush.bf16.msra.mxu0 %v994
    %1538 = vmatmul.bf16.gmra.mxu0 %v298
    %v1539 = vpop.f32.mrf.mxu0
    %v1540 = vadd.f32 %v1526, %v1539
    %v1541 = vpop.f32.mrf.mxu0
    %v1542 = vadd.f32 %v1528, %v1541
    %1543 = vdwg.mxu0
    %1544 = vmatpush.bf16.msra.mxu0 %v1054
    %1545 = vmatpush.bf16.msra.mxu0 %v1050
    %1546 = vmatpush.bf16.msra.mxu0 %v1046
    %1547 = vmatpush.bf16.msra.mxu0 %v1042
    %1548 = vmatpush.bf16.msra.mxu0 %v1038
    %1549 = vmatpush.bf16.msra.mxu0 %v1034
    %1550 = vmatpush.bf16.msra.mxu0 %v1030
    %1551 = vmatpush.bf16.msra.mxu0 %v1026
    %1552 = vmatmul.bf16.gmra.mxu0 %v299
    %v1553 = vpop.f32.mrf.mxu0
    %v1554 = vadd.f32 %v1540, %v1553
    %v1555 = vpop.f32.mrf.mxu0
    %v1556 = vadd.f32 %v1542, %v1555
    %1557 = vdwg.mxu0
    %1558 = vmatpush.bf16.msra.mxu0 %v1086
    %1559 = vmatpush.bf16.msra.mxu0 %v1082
    %1560 = vmatpush.bf16.msra.mxu0 %v1078
    %1561 = vmatpush.bf16.msra.mxu0 %v1074
    %1562 = vmatpush.bf16.msra.mxu0 %v1070
    %1563 = vmatpush.bf16.msra.mxu0 %v1066
    %1564 = vmatpush.bf16.msra.mxu0 %v1062
    %1565 = vmatpush.bf16.msra.mxu0 %v1058
    %1566 = vmatmul.bf16.gmra.mxu0 %v300
    %v1567 = vpop.f32.mrf.mxu0
    %v1568 = vadd.f32 %v1554, %v1567
    %v1569 = vpop.f32.mrf.mxu0
    %v1570 = vadd.f32 %v1556, %v1569
    %1571 = vdwg.mxu0
    %1572 = vmatpush.bf16.msra.mxu0 0
    %1573 = vmatpush.bf16.msra.mxu0 0
    %1574 = vmatpush.bf16.msra.mxu0 0
    %1575 = vmatpush.bf16.msra.mxu0 0
    %1576 = vmatpush.bf16.msra.mxu0 0
    %1577 = vmatpush.bf16.msra.mxu0 0
    %1578 = vmatpush.bf16.msra.mxu0 0
    %1579 = vmatpush.bf16.msra.mxu0 %v1090
    %1580 = vmatmul.bf16.gmra.mxu0 %v1290
    %v1581 = vpop.f32.mrf.mxu0
    %v1582 = vadd.f32 %v1568, %v1581
    %v1583 = vpop.f32.mrf.mxu0
    %v1584 = vadd.f32 %v1570, %v1583
    %1585 = vdwg.mxu0
    %1586 = vmatpush.bf16.msra.mxu0 %v927
    %1587 = vmatpush.bf16.msra.mxu0 %v923
    %1588 = vmatpush.bf16.msra.mxu0 %v919
    %1589 = vmatpush.bf16.msra.mxu0 %v915
    %1590 = vmatpush.bf16.msra.mxu0 %v911
    %1591 = vmatpush.bf16.msra.mxu0 %v907
    %1592 = vmatpush.bf16.msra.mxu0 %v903
    %1593 = vmatpush.bf16.msra.mxu0 %v899
    %1594 = vmatmul.bf16.gmra.mxu0 %v295
    %v1595 = vpop.f32.mrf.mxu0
    %v1596 = vadd.f32 %v268, %v1595
    %v1597 = vpop.f32.mrf.mxu0
    %v1598 = vadd.f32 %v268, %v1597
    %1599 = vdwg.mxu0
    %1600 = vmatpush.bf16.msra.mxu0 %v959
    %1601 = vmatpush.bf16.msra.mxu0 %v955
    %1602 = vmatpush.bf16.msra.mxu0 %v951
    %1603 = vmatpush.bf16.msra.mxu0 %v947
    %1604 = vmatpush.bf16.msra.mxu0 %v943
    %1605 = vmatpush.bf16.msra.mxu0 %v939
    %1606 = vmatpush.bf16.msra.mxu0 %v935
    %1607 = vmatpush.bf16.msra.mxu0 %v931
    %1608 = vmatmul.bf16.gmra.mxu0 %v296
    %v1609 = vpop.f32.mrf.mxu0
    %v1610 = vadd.f32 %v1596, %v1609
    %v1611 = vpop.f32.mrf.mxu0
    %v1612 = vadd.f32 %v1598, %v1611
    %1613 = vdwg.mxu0
    %1614 = vmatpush.bf16.msra.mxu0 %v991
    %1615 = vmatpush.bf16.msra.mxu0 %v987
    %1616 = vmatpush.bf16.msra.mxu0 %v983
    %1617 = vmatpush.bf16.msra.mxu0 %v979
    %1618 = vmatpush.bf16.msra.mxu0 %v975
    %1619 = vmatpush.bf16.msra.mxu0 %v971
    %1620 = vmatpush.bf16.msra.mxu0 %v967
    %1621 = vmatpush.bf16.msra.mxu0 %v963
    %1622 = vmatmul.bf16.gmra.mxu0 %v297
    %v1623 = vpop.f32.mrf.mxu0
    %v1624 = vadd.f32 %v1610, %v1623
    %v1625 = vpop.f32.mrf.mxu0
    %v1626 = vadd.f32 %v1612, %v1625
    %1627 = vdwg.mxu0
    %1628 = vmatpush.bf16.msra.mxu0 %v1023
    %1629 = vmatpush.bf16.msra.mxu0 %v1019
    %1630 = vmatpush.bf16.msra.mxu0 %v1015
    %1631 = vmatpush.bf16.msra.mxu0 %v1011
    %1632 = vmatpush.bf16.msra.mxu0 %v1007
    %1633 = vmatpush.bf16.msra.mxu0 %v1003
    %1634 = vmatpush.bf16.msra.mxu0 %v999
    %1635 = vmatpush.bf16.msra.mxu0 %v995
    %1636 = vmatmul.bf16.gmra.mxu0 %v298
    %v1637 = vpop.f32.mrf.mxu0
    %v1638 = vadd.f32 %v1624, %v1637
    %v1639 = vpop.f32.mrf.mxu0
    %v1640 = vadd.f32 %v1626, %v1639
    %1641 = vdwg.mxu0
    %1642 = vmatpush.bf16.msra.mxu0 %v1055
    %1643 = vmatpush.bf16.msra.mxu0 %v1051
    %1644 = vmatpush.bf16.msra.mxu0 %v1047
    %1645 = vmatpush.bf16.msra.mxu0 %v1043
    %1646 = vmatpush.bf16.msra.mxu0 %v1039
    %1647 = vmatpush.bf16.msra.mxu0 %v1035
    %1648 = vmatpush.bf16.msra.mxu0 %v1031
    %1649 = vmatpush.bf16.msra.mxu0 %v1027
    %1650 = vmatmul.bf16.gmra.mxu0 %v299
    %v1651 = vpop.f32.mrf.mxu0
    %v1652 = vadd.f32 %v1638, %v1651
    %v1653 = vpop.f32.mrf.mxu0
    %v1654 = vadd.f32 %v1640, %v1653
    %1655 = vdwg.mxu0
    %1656 = vmatpush.bf16.msra.mxu0 %v1087
    %1657 = vmatpush.bf16.msra.mxu0 %v1083
    %1658 = vmatpush.bf16.msra.mxu0 %v1079
    %1659 = vmatpush.bf16.msra.mxu0 %v1075
    %1660 = vmatpush.bf16.msra.mxu0 %v1071
    %1661 = vmatpush.bf16.msra.mxu0 %v1067
    %1662 = vmatpush.bf16.msra.mxu0 %v1063
    %1663 = vmatpush.bf16.msra.mxu0 %v1059
    %1664 = vmatmul.bf16.gmra.mxu0 %v300
    %v1665 = vpop.f32.mrf.mxu0
    %v1666 = vadd.f32 %v1652, %v1665
    %v1667 = vpop.f32.mrf.mxu0
    %v1668 = vadd.f32 %v1654, %v1667
    %1669 = vdwg.mxu0
    %1670 = vmatpush.bf16.msra.mxu0 0
    %1671 = vmatpush.bf16.msra.mxu0 0
    %1672 = vmatpush.bf16.msra.mxu0 0
    %1673 = vmatpush.bf16.msra.mxu0 0
    %1674 = vmatpush.bf16.msra.mxu0 0
    %1675 = vmatpush.bf16.msra.mxu0 0
    %1676 = vmatpush.bf16.msra.mxu0 0
    %1677 = vmatpush.bf16.msra.mxu0 %v1091
    %1678 = vmatmul.bf16.gmra.mxu0 %v1290
    %v1679 = vpop.f32.mrf.mxu0
    %v1680 = vadd.f32 %v1666, %v1679
    %v1681 = vpop.f32.mrf.mxu0
    %v1682 = vadd.f32 %v1668, %v1681
    %1683 = vdwg.mxu0
    %v1684 = vmax.f32 %v1386, 0.0
    %v1685 = vmax.f32 %v1484, 0.0
    %v1686 = vmax.f32 %v1582, 0.0
    %v1687 = vmax.f32 %v1680, 0.0
    %v1688 = vmax.f32 %v1388, 0.0
    %v1689 = vmax.f32 %v1486, 0.0
    %v1690 = vmax.f32 %v1584, 0.0
    %v1691 = vmax.f32 %v1682, 0.0
    %v1692 = vpack.c.bf16 %v1688, %v1684
    %v1693 = vpack.c.bf16 %v1689, %v1685
    %v1694 = vpack.c.bf16 %v1690, %v1686
    %v1695 = vpack.c.bf16 %v1691, %v1687
    %v1696 = vld [vmem:[#allocation4] sm:$0xff]
    %v1697 = vld [vmem:[#allocation4 + $0x8] sm:$0xff]
    %v1698 = vld [vmem:[#allocation4 + $0x10] sm:$0xff]
    %v1699 = vld [vmem:[#allocation4 + $0x18] sm:$0xff]
    %v1700 = vld [vmem:[#allocation4 + $0x20] sm:$0xff]
    %v1701 = vld [vmem:[#allocation4 + $0x28] sm:$0xff]
    %v1702 = vld [vmem:[#allocation4 + $0x30] sm:$0xff]
    %v1703 = vld [vmem:[#allocation4 + $0x38] sm:$0xff]
    %v1704 = vld [vmem:[#allocation4 + $0x40] sm:$0xff]
    %v1705 = vld [vmem:[#allocation4 + $0x48] sm:$0xff]
    %v1706 = vld [vmem:[#allocation4 + $0x50] sm:$0xff]
    %v1707 = vld [vmem:[#allocation4 + $0x58] sm:$0xff]
    %v1708 = vld [vmem:[#allocation4 + $0x60] sm:$0xff]
    %v1709 = vld [vmem:[#allocation4 + $0x68] sm:$0xff]
    %v1710 = vld [vmem:[#allocation4 + $0x70] sm:$0xff]
    %v1711 = vld [vmem:[#allocation4 + $0x78] sm:$0xff]
    %v1712 = vld [vmem:[#allocation4 + $0x80] sm:$0xff]
    %v1713 = vld [vmem:[#allocation4 + $0x88] sm:$0xff]
    %v1714 = vld [vmem:[#allocation4 + $0x90] sm:$0xff]
    %v1715 = vld [vmem:[#allocation4 + $0x98] sm:$0xff]
    %v1716 = vld [vmem:[#allocation4 + $0xa0] sm:$0xff]
    %v1717 = vld [vmem:[#allocation4 + $0xa8] sm:$0xff]
    %v1718 = vld [vmem:[#allocation4 + $0xb0] sm:$0xff]
    %v1719 = vld [vmem:[#allocation4 + $0xb8] sm:$0xff]
    %v1720 = vld [vmem:[#allocation4 + $0xc0] sm:$0xff]
    %v1721 = vld [vmem:[#allocation4 + $0xc8] sm:$0xff]
    %v1722 = vld [vmem:[#allocation4 + $0xd0] sm:$0xff]
    %v1723 = vld [vmem:[#allocation4 + $0xd8] sm:$0xff]
    %v1724 = vld [vmem:[#allocation4 + $0xe0] sm:$0xff]
    %v1725 = vld [vmem:[#allocation4 + $0xe8] sm:$0xff]
    %v1726 = vld [vmem:[#allocation4 + $0xf0] sm:$0xff]
    %v1727 = vld [vmem:[#allocation4 + $0xf8] sm:$0xff]
    %v1728 = vld [vmem:[#allocation4 + $0x100] sm:$0xff]
    %v1729 = vld [vmem:[#allocation4 + $0x108] sm:$0xff]
    %v1730 = vld [vmem:[#allocation4 + $0x110] sm:$0xff]
    %v1731 = vld [vmem:[#allocation4 + $0x118] sm:$0xff]
    %v1732 = vld [vmem:[#allocation4 + $0x120] sm:$0xff]
    %v1733 = vld [vmem:[#allocation4 + $0x128] sm:$0xff]
    %v1734 = vld [vmem:[#allocation4 + $0x130] sm:$0xff]
    %v1735 = vld [vmem:[#allocation4 + $0x138] sm:$0xff]
    %v1736 = vld [vmem:[#allocation4 + $0x140] sm:$0xff]
    %v1737 = vld [vmem:[#allocation4 + $0x148] sm:$0xff]
    %v1738 = vld [vmem:[#allocation4 + $0x150] sm:$0xff]
    %v1739 = vld [vmem:[#allocation4 + $0x158] sm:$0xff]
    %v1740 = vld [vmem:[#allocation4 + $0x160] sm:$0xff]
    %v1741 = vld [vmem:[#allocation4 + $0x168] sm:$0xff]
    %v1742 = vld [vmem:[#allocation4 + $0x170] sm:$0xff]
    %v1743 = vld [vmem:[#allocation4 + $0x178] sm:$0xff]
    %v1744 = vld [vmem:[#allocation4 + $0x180] sm:$0xff]
    %v1745 = vld [vmem:[#allocation4 + $0x188] sm:$0xff]
    %v1746 = vld [vmem:[#allocation4 + $0x190] sm:$0xff]
    %v1747 = vld [vmem:[#allocation4 + $0x198] sm:$0xff]
    %v1748 = vld [vmem:[#allocation4 + $0x1a0] sm:$0xff]
    %v1749 = vld [vmem:[#allocation4 + $0x1a8] sm:$0xff]
    %v1750 = vld [vmem:[#allocation4 + $0x1b0] sm:$0xff]
    %v1751 = vld [vmem:[#allocation4 + $0x1b8] sm:$0xff]
    %v1752 = vld [vmem:[#allocation4 + $0x1c0] sm:$0xff]
    %v1753 = vld [vmem:[#allocation4 + $0x1c8] sm:$0xff]
    %v1754 = vld [vmem:[#allocation4 + $0x1d0] sm:$0xff]
    %v1755 = vld [vmem:[#allocation4 + $0x1d8] sm:$0xff]
    %v1756 = vld [vmem:[#allocation4 + $0x1e0] sm:$0xff]
    %v1757 = vld [vmem:[#allocation4 + $0x1e8] sm:$0xff]
    %v1758 = vld [vmem:[#allocation4 + $0x1f0] sm:$0xff]
    %v1759 = vld [vmem:[#allocation4 + $0x1f8] sm:$0xff]
    %v1760 = vld [vmem:[#allocation4 + $0x200] sm:$0xff]
    %v1761 = vld [vmem:[#allocation4 + $0x208] sm:$0xff]
    %v1762 = vld [vmem:[#allocation4 + $0x210] sm:$0xff]
    %v1763 = vld [vmem:[#allocation4 + $0x218] sm:$0xff]
    %v1764 = vld [vmem:[#allocation4 + $0x220] sm:$0xff]
    %v1765 = vld [vmem:[#allocation4 + $0x228] sm:$0xff]
    %v1766 = vld [vmem:[#allocation4 + $0x230] sm:$0xff]
    %v1767 = vld [vmem:[#allocation4 + $0x238] sm:$0xff]
    %v1768 = vld [vmem:[#allocation4 + $0x240] sm:$0xff]
    %v1769 = vld [vmem:[#allocation4 + $0x248] sm:$0xff]
    %v1770 = vld [vmem:[#allocation4 + $0x250] sm:$0xff]
    %v1771 = vld [vmem:[#allocation4 + $0x258] sm:$0xff]
    %v1772 = vld [vmem:[#allocation4 + $0x260] sm:$0xff]
    %v1773 = vld [vmem:[#allocation4 + $0x268] sm:$0xff]
    %v1774 = vld [vmem:[#allocation4 + $0x270] sm:$0xff]
    %v1775 = vld [vmem:[#allocation4 + $0x278] sm:$0xff]
    %v1776 = vld [vmem:[#allocation4 + $0x280] sm:$0xff]
    %v1777 = vld [vmem:[#allocation4 + $0x288] sm:$0xff]
    %v1778 = vld [vmem:[#allocation4 + $0x290] sm:$0xff]
    %v1779 = vld [vmem:[#allocation4 + $0x298] sm:$0xff]
    %v1780 = vld [vmem:[#allocation4 + $0x2a0] sm:$0xff]
    %v1781 = vld [vmem:[#allocation4 + $0x2a8] sm:$0xff]
    %v1782 = vld [vmem:[#allocation4 + $0x2b0] sm:$0xff]
    %v1783 = vld [vmem:[#allocation4 + $0x2b8] sm:$0xff]
    %v1784 = vld [vmem:[#allocation4 + $0x2c0] sm:$0xff]
    %v1785 = vld [vmem:[#allocation4 + $0x2c8] sm:$0xff]
    %v1786 = vld [vmem:[#allocation4 + $0x2d0] sm:$0xff]
    %v1787 = vld [vmem:[#allocation4 + $0x2d8] sm:$0xff]
    %v1788 = vld [vmem:[#allocation4 + $0x2e0] sm:$0xff]
    %v1789 = vld [vmem:[#allocation4 + $0x2e8] sm:$0xff]
    %v1790 = vld [vmem:[#allocation4 + $0x2f0] sm:$0xff]
    %v1791 = vld [vmem:[#allocation4 + $0x2f8] sm:$0xff]
    %v1792 = vld [vmem:[#allocation4 + $0x300] sm:$0xff]
    %v1793 = vld [vmem:[#allocation4 + $0x308] sm:$0xff]
    %v1794 = vld [vmem:[#allocation4 + $0x310] sm:$0xff]
    %v1795 = vld [vmem:[#allocation4 + $0x318] sm:$0xff]
    %v1796 = vld [vmem:[#allocation4 + $0x320] sm:$0xff]
    %v1797 = vld [vmem:[#allocation4 + $0x328] sm:$0xff]
    %v1798 = vld [vmem:[#allocation4 + $0x330] sm:$0xff]
    %v1799 = vld [vmem:[#allocation4 + $0x338] sm:$0xff]
    %v1800 = vld [vmem:[#allocation4 + $0x340] sm:$0xff]
    %v1801 = vld [vmem:[#allocation4 + $0x348] sm:$0xff]
    %v1802 = vld [vmem:[#allocation4 + $0x350] sm:$0xff]
    %v1803 = vld [vmem:[#allocation4 + $0x358] sm:$0xff]
    %v1804 = vld [vmem:[#allocation4 + $0x360] sm:$0xff]
    %v1805 = vld [vmem:[#allocation4 + $0x368] sm:$0xff]
    %v1806 = vld [vmem:[#allocation4 + $0x370] sm:$0xff]
    %v1807 = vld [vmem:[#allocation4 + $0x378] sm:$0xff]
    %v1808 = vld [vmem:[#allocation4 + $0x380] sm:$0xff]
    %v1809 = vld [vmem:[#allocation4 + $0x388] sm:$0xff]
    %v1810 = vld [vmem:[#allocation4 + $0x390] sm:$0xff]
    %v1811 = vld [vmem:[#allocation4 + $0x398] sm:$0xff]
    %v1812 = vld [vmem:[#allocation4 + $0x3a0] sm:$0xff]
    %v1813 = vld [vmem:[#allocation4 + $0x3a8] sm:$0xff]
    %v1814 = vld [vmem:[#allocation4 + $0x3b0] sm:$0xff]
    %v1815 = vld [vmem:[#allocation4 + $0x3b8] sm:$0xff]
    %v1816 = vld [vmem:[#allocation4 + $0x3c0] sm:$0xff]
    %v1817 = vld [vmem:[#allocation4 + $0x3c8] sm:$0xff]
    %v1818 = vld [vmem:[#allocation4 + $0x3d0] sm:$0xff]
    %v1819 = vld [vmem:[#allocation4 + $0x3d8] sm:$0xff]
    %v1820 = vld [vmem:[#allocation4 + $0x3e0] sm:$0xff]
    %v1821 = vld [vmem:[#allocation4 + $0x3e8] sm:$0xff]
    %v1822 = vld [vmem:[#allocation4 + $0x3f0] sm:$0xff]
    %v1823 = vld [vmem:[#allocation4 + $0x3f8] sm:$0xff]
    %v1824 = vld [vmem:[%s4] sm:$0xf]
    %v1826 = vperm.slane %v1824, 0
    %v1827 = vperm.slane %v1824, 1
    %v1828 = vperm.slane %v1824, 2
    %v1829 = vperm.slane %v1824, 3
    %v1962 = vunpack.c.l.b16 %v1696
    %v1963 = vunpack.c.h.b16 %v1696
    %v1964 = vunpack.c.l.b16 %v1697
    %v1965 = vunpack.c.h.b16 %v1697
    %v1966 = vunpack.c.l.b16 %v1698
    %v1967 = vunpack.c.h.b16 %v1698
    %v1968 = vunpack.c.l.b16 %v1699
    %v1969 = vunpack.c.h.b16 %v1699
    %v1970 = vunpack.c.l.b16 %v1700
    %v1971 = vunpack.c.h.b16 %v1700
    %v1972 = vunpack.c.l.b16 %v1701
    %v1973 = vunpack.c.h.b16 %v1701
    %v1974 = vunpack.c.l.b16 %v1702
    %v1975 = vunpack.c.h.b16 %v1702
    %v1976 = vunpack.c.l.b16 %v1703
    %v1977 = vunpack.c.h.b16 %v1703
    %v1978 = vunpack.c.l.b16 %v1704
    %v1979 = vunpack.c.h.b16 %v1704
    %v1980 = vunpack.c.l.b16 %v1705
    %v1981 = vunpack.c.h.b16 %v1705
    %v1982 = vunpack.c.l.b16 %v1706
    %v1983 = vunpack.c.h.b16 %v1706
    %v1984 = vunpack.c.l.b16 %v1707
    %v1985 = vunpack.c.h.b16 %v1707
    %v1986 = vunpack.c.l.b16 %v1708
    %v1987 = vunpack.c.h.b16 %v1708
    %v1988 = vunpack.c.l.b16 %v1709
    %v1989 = vunpack.c.h.b16 %v1709
    %v1990 = vunpack.c.l.b16 %v1710
    %v1991 = vunpack.c.h.b16 %v1710
    %v1992 = vunpack.c.l.b16 %v1711
    %v1993 = vunpack.c.h.b16 %v1711
    %v1994 = vunpack.c.l.b16 %v1712
    %v1995 = vunpack.c.h.b16 %v1712
    %v1996 = vunpack.c.l.b16 %v1713
    %v1997 = vunpack.c.h.b16 %v1713
    %v1998 = vunpack.c.l.b16 %v1714
    %v1999 = vunpack.c.h.b16 %v1714
    %v2000 = vunpack.c.l.b16 %v1715
    %v2001 = vunpack.c.h.b16 %v1715
    %v2002 = vunpack.c.l.b16 %v1716
    %v2003 = vunpack.c.h.b16 %v1716
    %v2004 = vunpack.c.l.b16 %v1717
    %v2005 = vunpack.c.h.b16 %v1717
    %v2006 = vunpack.c.l.b16 %v1718
    %v2007 = vunpack.c.h.b16 %v1718
    %v2008 = vunpack.c.l.b16 %v1719
    %v2009 = vunpack.c.h.b16 %v1719
    %v2010 = vunpack.c.l.b16 %v1720
    %v2011 = vunpack.c.h.b16 %v1720
    %v2012 = vunpack.c.l.b16 %v1721
    %v2013 = vunpack.c.h.b16 %v1721
    %v2014 = vunpack.c.l.b16 %v1722
    %v2015 = vunpack.c.h.b16 %v1722
    %v2016 = vunpack.c.l.b16 %v1723
    %v2017 = vunpack.c.h.b16 %v1723
    %v2018 = vunpack.c.l.b16 %v1724
    %v2019 = vunpack.c.h.b16 %v1724
    %v2020 = vunpack.c.l.b16 %v1725
    %v2021 = vunpack.c.h.b16 %v1725
    %v2022 = vunpack.c.l.b16 %v1726
    %v2023 = vunpack.c.h.b16 %v1726
    %v2024 = vunpack.c.l.b16 %v1727
    %v2025 = vunpack.c.h.b16 %v1727
    %v2026 = vunpack.c.l.b16 %v1728
    %v2027 = vunpack.c.h.b16 %v1728
    %v2028 = vunpack.c.l.b16 %v1729
    %v2029 = vunpack.c.h.b16 %v1729
    %v2030 = vunpack.c.l.b16 %v1730
    %v2031 = vunpack.c.h.b16 %v1730
    %v2032 = vunpack.c.l.b16 %v1731
    %v2033 = vunpack.c.h.b16 %v1731
    %v2034 = vunpack.c.l.b16 %v1732
    %v2035 = vunpack.c.h.b16 %v1732
    %v2036 = vunpack.c.l.b16 %v1733
    %v2037 = vunpack.c.h.b16 %v1733
    %v2038 = vunpack.c.l.b16 %v1734
    %v2039 = vunpack.c.h.b16 %v1734
    %v2040 = vunpack.c.l.b16 %v1735
    %v2041 = vunpack.c.h.b16 %v1735
    %v2042 = vunpack.c.l.b16 %v1736
    %v2043 = vunpack.c.h.b16 %v1736
    %v2044 = vunpack.c.l.b16 %v1737
    %v2045 = vunpack.c.h.b16 %v1737
    %v2046 = vunpack.c.l.b16 %v1738
    %v2047 = vunpack.c.h.b16 %v1738
    %v2048 = vunpack.c.l.b16 %v1739
    %v2049 = vunpack.c.h.b16 %v1739
    %v2050 = vunpack.c.l.b16 %v1740
    %v2051 = vunpack.c.h.b16 %v1740
    %v2052 = vunpack.c.l.b16 %v1741
    %v2053 = vunpack.c.h.b16 %v1741
    %v2054 = vunpack.c.l.b16 %v1742
    %v2055 = vunpack.c.h.b16 %v1742
    %v2056 = vunpack.c.l.b16 %v1743
    %v2057 = vunpack.c.h.b16 %v1743
    %v2058 = vunpack.c.l.b16 %v1744
    %v2059 = vunpack.c.h.b16 %v1744
    %v2060 = vunpack.c.l.b16 %v1745
    %v2061 = vunpack.c.h.b16 %v1745
    %v2062 = vunpack.c.l.b16 %v1746
    %v2063 = vunpack.c.h.b16 %v1746
    %v2064 = vunpack.c.l.b16 %v1747
    %v2065 = vunpack.c.h.b16 %v1747
    %v2066 = vunpack.c.l.b16 %v1748
    %v2067 = vunpack.c.h.b16 %v1748
    %v2068 = vunpack.c.l.b16 %v1749
    %v2069 = vunpack.c.h.b16 %v1749
    %v2070 = vunpack.c.l.b16 %v1750
    %v2071 = vunpack.c.h.b16 %v1750
    %v2072 = vunpack.c.l.b16 %v1751
    %v2073 = vunpack.c.h.b16 %v1751
    %v2074 = vunpack.c.l.b16 %v1752
    %v2075 = vunpack.c.h.b16 %v1752
    %v2076 = vunpack.c.l.b16 %v1753
    %v2077 = vunpack.c.h.b16 %v1753
    %v2078 = vunpack.c.l.b16 %v1754
    %v2079 = vunpack.c.h.b16 %v1754
    %v2080 = vunpack.c.l.b16 %v1755
    %v2081 = vunpack.c.h.b16 %v1755
    %v2082 = vunpack.c.l.b16 %v1756
    %v2083 = vunpack.c.h.b16 %v1756
    %v2084 = vunpack.c.l.b16 %v1757
    %v2085 = vunpack.c.h.b16 %v1757
    %v2086 = vunpack.c.l.b16 %v1758
    %v2087 = vunpack.c.h.b16 %v1758
    %v2088 = vunpack.c.l.b16 %v1759
    %v2089 = vunpack.c.h.b16 %v1759
    %v2090 = vunpack.c.l.b16 %v1760
    %v2091 = vunpack.c.h.b16 %v1760
    %v2092 = vunpack.c.l.b16 %v1761
    %v2093 = vunpack.c.h.b16 %v1761
    %v2094 = vunpack.c.l.b16 %v1762
    %v2095 = vunpack.c.h.b16 %v1762
    %v2096 = vunpack.c.l.b16 %v1763
    %v2097 = vunpack.c.h.b16 %v1763
    %v2098 = vunpack.c.l.b16 %v1764
    %v2099 = vunpack.c.h.b16 %v1764
    %v2100 = vunpack.c.l.b16 %v1765
    %v2101 = vunpack.c.h.b16 %v1765
    %v2102 = vunpack.c.l.b16 %v1766
    %v2103 = vunpack.c.h.b16 %v1766
    %v2104 = vunpack.c.l.b16 %v1767
    %v2105 = vunpack.c.h.b16 %v1767
    %v2106 = vunpack.c.l.b16 %v1768
    %v2107 = vunpack.c.h.b16 %v1768
    %v2108 = vunpack.c.l.b16 %v1769
    %v2109 = vunpack.c.h.b16 %v1769
    %v2110 = vunpack.c.l.b16 %v1770
    %v2111 = vunpack.c.h.b16 %v1770
    %v2112 = vunpack.c.l.b16 %v1771
    %v2113 = vunpack.c.h.b16 %v1771
    %v2114 = vunpack.c.l.b16 %v1772
    %v2115 = vunpack.c.h.b16 %v1772
    %v2116 = vunpack.c.l.b16 %v1773
    %v2117 = vunpack.c.h.b16 %v1773
    %v2118 = vunpack.c.l.b16 %v1774
    %v2119 = vunpack.c.h.b16 %v1774
    %v2120 = vunpack.c.l.b16 %v1775
    %v2121 = vunpack.c.h.b16 %v1775
    %v2122 = vunpack.c.l.b16 %v1776
    %v2123 = vunpack.c.h.b16 %v1776
    %v2124 = vunpack.c.l.b16 %v1777
    %v2125 = vunpack.c.h.b16 %v1777
    %v2126 = vunpack.c.l.b16 %v1778
    %v2127 = vunpack.c.h.b16 %v1778
    %v2128 = vunpack.c.l.b16 %v1779
    %v2129 = vunpack.c.h.b16 %v1779
    %v2130 = vunpack.c.l.b16 %v1780
    %v2131 = vunpack.c.h.b16 %v1780
    %v2132 = vunpack.c.l.b16 %v1781
    %v2133 = vunpack.c.h.b16 %v1781
    %v2134 = vunpack.c.l.b16 %v1782
    %v2135 = vunpack.c.h.b16 %v1782
    %v2136 = vunpack.c.l.b16 %v1783
    %v2137 = vunpack.c.h.b16 %v1783
    %v2138 = vunpack.c.l.b16 %v1784
    %v2139 = vunpack.c.h.b16 %v1784
    %v2140 = vunpack.c.l.b16 %v1785
    %v2141 = vunpack.c.h.b16 %v1785
    %v2142 = vunpack.c.l.b16 %v1786
    %v2143 = vunpack.c.h.b16 %v1786
    %v2144 = vunpack.c.l.b16 %v1787
    %v2145 = vunpack.c.h.b16 %v1787
    %v2146 = vunpack.c.l.b16 %v1788
    %v2147 = vunpack.c.h.b16 %v1788
    %v2148 = vunpack.c.l.b16 %v1789
    %v2149 = vunpack.c.h.b16 %v1789
    %v2150 = vunpack.c.l.b16 %v1790
    %v2151 = vunpack.c.h.b16 %v1790
    %v2152 = vunpack.c.l.b16 %v1791
    %v2153 = vunpack.c.h.b16 %v1791
    %v2154 = vunpack.c.l.b16 %v1792
    %v2155 = vunpack.c.h.b16 %v1792
    %v2156 = vunpack.c.l.b16 %v1793
    %v2157 = vunpack.c.h.b16 %v1793
    %v2158 = vunpack.c.l.b16 %v1794
    %v2159 = vunpack.c.h.b16 %v1794
    %v2160 = vunpack.c.l.b16 %v1795
    %v2161 = vunpack.c.h.b16 %v1795
    %v2162 = vunpack.c.l.b16 %v1796
    %v2163 = vunpack.c.h.b16 %v1796
    %v2164 = vunpack.c.l.b16 %v1797
    %v2165 = vunpack.c.h.b16 %v1797
    %v2166 = vunpack.c.l.b16 %v1798
    %v2167 = vunpack.c.h.b16 %v1798
    %v2168 = vunpack.c.l.b16 %v1799
    %v2169 = vunpack.c.h.b16 %v1799
    %v2170 = vunpack.c.l.b16 %v1800
    %v2171 = vunpack.c.h.b16 %v1800
    %v2172 = vunpack.c.l.b16 %v1801
    %v2173 = vunpack.c.h.b16 %v1801
    %v2174 = vunpack.c.l.b16 %v1802
    %v2175 = vunpack.c.h.b16 %v1802
    %v2176 = vunpack.c.l.b16 %v1803
    %v2177 = vunpack.c.h.b16 %v1803
    %v2178 = vunpack.c.l.b16 %v1804
    %v2179 = vunpack.c.h.b16 %v1804
    %v2180 = vunpack.c.l.b16 %v1805
    %v2181 = vunpack.c.h.b16 %v1805
    %v2182 = vunpack.c.l.b16 %v1806
    %v2183 = vunpack.c.h.b16 %v1806
    %v2184 = vunpack.c.l.b16 %v1807
    %v2185 = vunpack.c.h.b16 %v1807
    %v2186 = vunpack.c.l.b16 %v1808
    %v2187 = vunpack.c.h.b16 %v1808
    %v2188 = vunpack.c.l.b16 %v1809
    %v2189 = vunpack.c.h.b16 %v1809
    %v2190 = vunpack.c.l.b16 %v1810
    %v2191 = vunpack.c.h.b16 %v1810
    %v2192 = vunpack.c.l.b16 %v1811
    %v2193 = vunpack.c.h.b16 %v1811
    %v2194 = vunpack.c.l.b16 %v1812
    %v2195 = vunpack.c.h.b16 %v1812
    %v2196 = vunpack.c.l.b16 %v1813
    %v2197 = vunpack.c.h.b16 %v1813
    %v2198 = vunpack.c.l.b16 %v1814
    %v2199 = vunpack.c.h.b16 %v1814
    %v2200 = vunpack.c.l.b16 %v1815
    %v2201 = vunpack.c.h.b16 %v1815
    %v2202 = vunpack.c.l.b16 %v1816
    %v2203 = vunpack.c.h.b16 %v1816
    %v2204 = vunpack.c.l.b16 %v1817
    %v2205 = vunpack.c.h.b16 %v1817
    %v2206 = vunpack.c.l.b16 %v1818
    %v2207 = vunpack.c.h.b16 %v1818
    %v2208 = vunpack.c.l.b16 %v1819
    %v2209 = vunpack.c.h.b16 %v1819
    %v2210 = vunpack.c.l.b16 %v1820
    %v2211 = vunpack.c.h.b16 %v1820
    %v2212 = vunpack.c.l.b16 %v1821
    %v2213 = vunpack.c.h.b16 %v1821
    %v2214 = vunpack.c.l.b16 %v1822
    %v2215 = vunpack.c.h.b16 %v1822
    %v2216 = vunpack.c.l.b16 %v1823
    %v2217 = vunpack.c.h.b16 %v1823
    %v2218 = vpack.c.b16 %v1966, %v1962
    %v2219 = vpack.c.b16 %v1967, %v1963
    %v2220 = vpack.c.b16 %v1968, %v1964
    %v2221 = vpack.c.b16 %v1969, %v1965
    %v2222 = vpack.c.b16 %v1974, %v1970
    %v2223 = vpack.c.b16 %v1975, %v1971
    %v2224 = vpack.c.b16 %v1976, %v1972
    %v2225 = vpack.c.b16 %v1977, %v1973
    %v2226 = vpack.c.b16 %v1982, %v1978
    %v2227 = vpack.c.b16 %v1983, %v1979
    %v2228 = vpack.c.b16 %v1984, %v1980
    %v2229 = vpack.c.b16 %v1985, %v1981
    %v2230 = vpack.c.b16 %v1990, %v1986
    %v2231 = vpack.c.b16 %v1991, %v1987
    %v2232 = vpack.c.b16 %v1992, %v1988
    %v2233 = vpack.c.b16 %v1993, %v1989
    %v2234 = vpack.c.b16 %v1998, %v1994
    %v2235 = vpack.c.b16 %v1999, %v1995
    %v2236 = vpack.c.b16 %v2000, %v1996
    %v2237 = vpack.c.b16 %v2001, %v1997
    %v2238 = vpack.c.b16 %v2006, %v2002
    %v2239 = vpack.c.b16 %v2007, %v2003
    %v2240 = vpack.c.b16 %v2008, %v2004
    %v2241 = vpack.c.b16 %v2009, %v2005
    %v2242 = vpack.c.b16 %v2014, %v2010
    %v2243 = vpack.c.b16 %v2015, %v2011
    %v2244 = vpack.c.b16 %v2016, %v2012
    %v2245 = vpack.c.b16 %v2017, %v2013
    %v2246 = vpack.c.b16 %v2022, %v2018
    %v2247 = vpack.c.b16 %v2023, %v2019
    %v2248 = vpack.c.b16 %v2024, %v2020
    %v2249 = vpack.c.b16 %v2025, %v2021
    %v2250 = vpack.c.b16 %v2030, %v2026
    %v2251 = vpack.c.b16 %v2031, %v2027
    %v2252 = vpack.c.b16 %v2032, %v2028
    %v2253 = vpack.c.b16 %v2033, %v2029
    %v2254 = vpack.c.b16 %v2038, %v2034
    %v2255 = vpack.c.b16 %v2039, %v2035
    %v2256 = vpack.c.b16 %v2040, %v2036
    %v2257 = vpack.c.b16 %v2041, %v2037
    %v2258 = vpack.c.b16 %v2046, %v2042
    %v2259 = vpack.c.b16 %v2047, %v2043
    %v2260 = vpack.c.b16 %v2048, %v2044
    %v2261 = vpack.c.b16 %v2049, %v2045
    %v2262 = vpack.c.b16 %v2054, %v2050
    %v2263 = vpack.c.b16 %v2055, %v2051
    %v2264 = vpack.c.b16 %v2056, %v2052
    %v2265 = vpack.c.b16 %v2057, %v2053
    %v2266 = vpack.c.b16 %v2062, %v2058
    %v2267 = vpack.c.b16 %v2063, %v2059
    %v2268 = vpack.c.b16 %v2064, %v2060
    %v2269 = vpack.c.b16 %v2065, %v2061
    %v2270 = vpack.c.b16 %v2070, %v2066
    %v2271 = vpack.c.b16 %v2071, %v2067
    %v2272 = vpack.c.b16 %v2072, %v2068
    %v2273 = vpack.c.b16 %v2073, %v2069
    %v2274 = vpack.c.b16 %v2078, %v2074
    %v2275 = vpack.c.b16 %v2079, %v2075
    %v2276 = vpack.c.b16 %v2080, %v2076
    %v2277 = vpack.c.b16 %v2081, %v2077
    %v2278 = vpack.c.b16 %v2086, %v2082
    %v2279 = vpack.c.b16 %v2087, %v2083
    %v2280 = vpack.c.b16 %v2088, %v2084
    %v2281 = vpack.c.b16 %v2089, %v2085
    %v2282 = vpack.c.b16 %v2094, %v2090
    %v2283 = vpack.c.b16 %v2095, %v2091
    %v2284 = vpack.c.b16 %v2096, %v2092
    %v2285 = vpack.c.b16 %v2097, %v2093
    %v2286 = vpack.c.b16 %v2102, %v2098
    %v2287 = vpack.c.b16 %v2103, %v2099
    %v2288 = vpack.c.b16 %v2104, %v2100
    %v2289 = vpack.c.b16 %v2105, %v2101
    %v2290 = vpack.c.b16 %v2110, %v2106
    %v2291 = vpack.c.b16 %v2111, %v2107
    %v2292 = vpack.c.b16 %v2112, %v2108
    %v2293 = vpack.c.b16 %v2113, %v2109
    %v2294 = vpack.c.b16 %v2118, %v2114
    %v2295 = vpack.c.b16 %v2119, %v2115
    %v2296 = vpack.c.b16 %v2120, %v2116
    %v2297 = vpack.c.b16 %v2121, %v2117
    %v2298 = vpack.c.b16 %v2126, %v2122
    %v2299 = vpack.c.b16 %v2127, %v2123
    %v2300 = vpack.c.b16 %v2128, %v2124
    %v2301 = vpack.c.b16 %v2129, %v2125
    %v2302 = vpack.c.b16 %v2134, %v2130
    %v2303 = vpack.c.b16 %v2135, %v2131
    %v2304 = vpack.c.b16 %v2136, %v2132
    %v2305 = vpack.c.b16 %v2137, %v2133
    %v2306 = vpack.c.b16 %v2142, %v2138
    %v2307 = vpack.c.b16 %v2143, %v2139
    %v2308 = vpack.c.b16 %v2144, %v2140
    %v2309 = vpack.c.b16 %v2145, %v2141
    %v2310 = vpack.c.b16 %v2150, %v2146
    %v2311 = vpack.c.b16 %v2151, %v2147
    %v2312 = vpack.c.b16 %v2152, %v2148
    %v2313 = vpack.c.b16 %v2153, %v2149
    %v2314 = vpack.c.b16 %v2158, %v2154
    %v2315 = vpack.c.b16 %v2159, %v2155
    %v2316 = vpack.c.b16 %v2160, %v2156
    %v2317 = vpack.c.b16 %v2161, %v2157
    %v2318 = vpack.c.b16 %v2166, %v2162
    %v2319 = vpack.c.b16 %v2167, %v2163
    %v2320 = vpack.c.b16 %v2168, %v2164
    %v2321 = vpack.c.b16 %v2169, %v2165
    %v2322 = vpack.c.b16 %v2174, %v2170
    %v2323 = vpack.c.b16 %v2175, %v2171
    %v2324 = vpack.c.b16 %v2176, %v2172
    %v2325 = vpack.c.b16 %v2177, %v2173
    %v2326 = vpack.c.b16 %v2182, %v2178
    %v2327 = vpack.c.b16 %v2183, %v2179
    %v2328 = vpack.c.b16 %v2184, %v2180
    %v2329 = vpack.c.b16 %v2185, %v2181
    %v2330 = vpack.c.b16 %v2190, %v2186
    %v2331 = vpack.c.b16 %v2191, %v2187
    %v2332 = vpack.c.b16 %v2192, %v2188
    %v2333 = vpack.c.b16 %v2193, %v2189
    %v2334 = vpack.c.b16 %v2198, %v2194
    %v2335 = vpack.c.b16 %v2199, %v2195
    %v2336 = vpack.c.b16 %v2200, %v2196
    %v2337 = vpack.c.b16 %v2201, %v2197
    %v2338 = vpack.c.b16 %v2206, %v2202
    %v2339 = vpack.c.b16 %v2207, %v2203
    %v2340 = vpack.c.b16 %v2208, %v2204
    %v2341 = vpack.c.b16 %v2209, %v2205
    %v2342 = vpack.c.b16 %v2214, %v2210
    %v2343 = vpack.c.b16 %v2215, %v2211
    %v2344 = vpack.c.b16 %v2216, %v2212
    %v2345 = vpack.c.b16 %v2217, %v2213
    %2474 = vmatpush.bf16.msra.mxu0 %v2246
    %2475 = vmatpush.bf16.msra.mxu0 %v2242
    %2476 = vmatpush.bf16.msra.mxu0 %v2238
    %2477 = vmatpush.bf16.msra.mxu0 %v2234
    %2478 = vmatpush.bf16.msra.mxu0 %v2230
    %2479 = vmatpush.bf16.msra.mxu0 %v2226
    %2480 = vmatpush.bf16.msra.mxu0 %v2222
    %2481 = vmatpush.bf16.msra.mxu0 %v2218
    %2482 = vmatmul.bf16.gmra.mxu0 %v1692
    %v2483 = vpop.f32.mrf.mxu0
    %v2484 = vadd.f32 %v1826, %v2483
    %v2485 = vpop.f32.mrf.mxu0
    %v2486 = vadd.f32 %v1826, %v2485
    %2487 = vdwg.mxu0
    %2488 = vmatpush.bf16.msra.mxu0 %v2278
    %2489 = vmatpush.bf16.msra.mxu0 %v2274
    %2490 = vmatpush.bf16.msra.mxu0 %v2270
    %2491 = vmatpush.bf16.msra.mxu0 %v2266
    %2492 = vmatpush.bf16.msra.mxu0 %v2262
    %2493 = vmatpush.bf16.msra.mxu0 %v2258
    %2494 = vmatpush.bf16.msra.mxu0 %v2254
    %2495 = vmatpush.bf16.msra.mxu0 %v2250
    %2496 = vmatmul.bf16.gmra.mxu0 %v1693
    %v2497 = vpop.f32.mrf.mxu0
    %v2498 = vadd.f32 %v2484, %v2497
    %v2499 = vpop.f32.mrf.mxu0
    %v2500 = vadd.f32 %v2486, %v2499
    %2501 = vdwg.mxu0
    %2502 = vmatpush.bf16.msra.mxu0 %v2310
    %2503 = vmatpush.bf16.msra.mxu0 %v2306
    %2504 = vmatpush.bf16.msra.mxu0 %v2302
    %2505 = vmatpush.bf16.msra.mxu0 %v2298
    %2506 = vmatpush.bf16.msra.mxu0 %v2294
    %2507 = vmatpush.bf16.msra.mxu0 %v2290
    %2508 = vmatpush.bf16.msra.mxu0 %v2286
    %2509 = vmatpush.bf16.msra.mxu0 %v2282
    %2510 = vmatmul.bf16.gmra.mxu0 %v1694
    %v2511 = vpop.f32.mrf.mxu0
    %v2512 = vadd.f32 %v2498, %v2511
    %v2513 = vpop.f32.mrf.mxu0
    %v2514 = vadd.f32 %v2500, %v2513
    %2515 = vdwg.mxu0
    %2516 = vmatpush.bf16.msra.mxu0 %v2342
    %2517 = vmatpush.bf16.msra.mxu0 %v2338
    %2518 = vmatpush.bf16.msra.mxu0 %v2334
    %2519 = vmatpush.bf16.msra.mxu0 %v2330
    %2520 = vmatpush.bf16.msra.mxu0 %v2326
    %2521 = vmatpush.bf16.msra.mxu0 %v2322
    %2522 = vmatpush.bf16.msra.mxu0 %v2318
    %2523 = vmatpush.bf16.msra.mxu0 %v2314
    %2524 = vmatmul.bf16.gmra.mxu0 %v1695
    %v2525 = vpop.f32.mrf.mxu0
    %v2526 = vadd.f32 %v2512, %v2525
    %v2527 = vpop.f32.mrf.mxu0
    %v2528 = vadd.f32 %v2514, %v2527
    %2529 = vdwg.mxu0
    %2530 = vmatpush.bf16.msra.mxu0 %v2247
    %2531 = vmatpush.bf16.msra.mxu0 %v2243
    %2532 = vmatpush.bf16.msra.mxu0 %v2239
    %2533 = vmatpush.bf16.msra.mxu0 %v2235
    %2534 = vmatpush.bf16.msra.mxu0 %v2231
    %2535 = vmatpush.bf16.msra.mxu0 %v2227
    %2536 = vmatpush.bf16.msra.mxu0 %v2223
    %2537 = vmatpush.bf16.msra.mxu0 %v2219
    %2538 = vmatmul.bf16.gmra.mxu0 %v1692
    %v2539 = vpop.f32.mrf.mxu0
    %v2540 = vadd.f32 %v1827, %v2539
    %v2541 = vpop.f32.mrf.mxu0
    %v2542 = vadd.f32 %v1827, %v2541
    %2543 = vdwg.mxu0
    %2544 = vmatpush.bf16.msra.mxu0 %v2279
    %2545 = vmatpush.bf16.msra.mxu0 %v2275
    %2546 = vmatpush.bf16.msra.mxu0 %v2271
    %2547 = vmatpush.bf16.msra.mxu0 %v2267
    %2548 = vmatpush.bf16.msra.mxu0 %v2263
    %2549 = vmatpush.bf16.msra.mxu0 %v2259
    %2550 = vmatpush.bf16.msra.mxu0 %v2255
    %2551 = vmatpush.bf16.msra.mxu0 %v2251
    %2552 = vmatmul.bf16.gmra.mxu0 %v1693
    %v2553 = vpop.f32.mrf.mxu0
    %v2554 = vadd.f32 %v2540, %v2553
    %v2555 = vpop.f32.mrf.mxu0
    %v2556 = vadd.f32 %v2542, %v2555
    %2557 = vdwg.mxu0
    %2558 = vmatpush.bf16.msra.mxu0 %v2311
    %2559 = vmatpush.bf16.msra.mxu0 %v2307
    %2560 = vmatpush.bf16.msra.mxu0 %v2303
    %2561 = vmatpush.bf16.msra.mxu0 %v2299
    %2562 = vmatpush.bf16.msra.mxu0 %v2295
    %2563 = vmatpush.bf16.msra.mxu0 %v2291
    %2564 = vmatpush.bf16.msra.mxu0 %v2287
    %2565 = vmatpush.bf16.msra.mxu0 %v2283
    %2566 = vmatmul.bf16.gmra.mxu0 %v1694
    %v2567 = vpop.f32.mrf.mxu0
    %v2568 = vadd.f32 %v2554, %v2567
    %v2569 = vpop.f32.mrf.mxu0
    %v2570 = vadd.f32 %v2556, %v2569
    %2571 = vdwg.mxu0
    %2572 = vmatpush.bf16.msra.mxu0 %v2343
    %2573 = vmatpush.bf16.msra.mxu0 %v2339
    %2574 = vmatpush.bf16.msra.mxu0 %v2335
    %2575 = vmatpush.bf16.msra.mxu0 %v2331
    %2576 = vmatpush.bf16.msra.mxu0 %v2327
    %2577 = vmatpush.bf16.msra.mxu0 %v2323
    %2578 = vmatpush.bf16.msra.mxu0 %v2319
    %2579 = vmatpush.bf16.msra.mxu0 %v2315
    %2580 = vmatmul.bf16.gmra.mxu0 %v1695
    %v2581 = vpop.f32.mrf.mxu0
    %v2582 = vadd.f32 %v2568, %v2581
    %v2583 = vpop.f32.mrf.mxu0
    %v2584 = vadd.f32 %v2570, %v2583
    %2585 = vdwg.mxu0
    %2586 = vmatpush.bf16.msra.mxu0 %v2248
    %2587 = vmatpush.bf16.msra.mxu0 %v2244
    %2588 = vmatpush.bf16.msra.mxu0 %v2240
    %2589 = vmatpush.bf16.msra.mxu0 %v2236
    %2590 = vmatpush.bf16.msra.mxu0 %v2232
    %2591 = vmatpush.bf16.msra.mxu0 %v2228
    %2592 = vmatpush.bf16.msra.mxu0 %v2224
    %2593 = vmatpush.bf16.msra.mxu0 %v2220
    %2594 = vmatmul.bf16.gmra.mxu0 %v1692
    %v2595 = vpop.f32.mrf.mxu0
    %v2596 = vadd.f32 %v1828, %v2595
    %v2597 = vpop.f32.mrf.mxu0
    %v2598 = vadd.f32 %v1828, %v2597
    %2599 = vdwg.mxu0
    %2600 = vmatpush.bf16.msra.mxu0 %v2280
    %2601 = vmatpush.bf16.msra.mxu0 %v2276
    %2602 = vmatpush.bf16.msra.mxu0 %v2272
    %2603 = vmatpush.bf16.msra.mxu0 %v2268
    %2604 = vmatpush.bf16.msra.mxu0 %v2264
    %2605 = vmatpush.bf16.msra.mxu0 %v2260
    %2606 = vmatpush.bf16.msra.mxu0 %v2256
    %2607 = vmatpush.bf16.msra.mxu0 %v2252
    %2608 = vmatmul.bf16.gmra.mxu0 %v1693
    %v2609 = vpop.f32.mrf.mxu0
    %v2610 = vadd.f32 %v2596, %v2609
    %v2611 = vpop.f32.mrf.mxu0
    %v2612 = vadd.f32 %v2598, %v2611
    %2613 = vdwg.mxu0
    %2614 = vmatpush.bf16.msra.mxu0 %v2312
    %2615 = vmatpush.bf16.msra.mxu0 %v2308
    %2616 = vmatpush.bf16.msra.mxu0 %v2304
    %2617 = vmatpush.bf16.msra.mxu0 %v2300
    %2618 = vmatpush.bf16.msra.mxu0 %v2296
    %2619 = vmatpush.bf16.msra.mxu0 %v2292
    %2620 = vmatpush.bf16.msra.mxu0 %v2288
    %2621 = vmatpush.bf16.msra.mxu0 %v2284
    %2622 = vmatmul.bf16.gmra.mxu0 %v1694
    %v2623 = vpop.f32.mrf.mxu0
    %v2624 = vadd.f32 %v2610, %v2623
    %v2625 = vpop.f32.mrf.mxu0
    %v2626 = vadd.f32 %v2612, %v2625
    %2627 = vdwg.mxu0
    %2628 = vmatpush.bf16.msra.mxu0 %v2344
    %2629 = vmatpush.bf16.msra.mxu0 %v2340
    %2630 = vmatpush.bf16.msra.mxu0 %v2336
    %2631 = vmatpush.bf16.msra.mxu0 %v2332
    %2632 = vmatpush.bf16.msra.mxu0 %v2328
    %2633 = vmatpush.bf16.msra.mxu0 %v2324
    %2634 = vmatpush.bf16.msra.mxu0 %v2320
    %2635 = vmatpush.bf16.msra.mxu0 %v2316
    %2636 = vmatmul.bf16.gmra.mxu0 %v1695
    %v2637 = vpop.f32.mrf.mxu0
    %v2638 = vadd.f32 %v2624, %v2637
    %v2639 = vpop.f32.mrf.mxu0
    %v2640 = vadd.f32 %v2626, %v2639
    %2641 = vdwg.mxu0
    %2642 = vmatpush.bf16.msra.mxu0 %v2249
    %2643 = vmatpush.bf16.msra.mxu0 %v2245
    %2644 = vmatpush.bf16.msra.mxu0 %v2241
    %2645 = vmatpush.bf16.msra.mxu0 %v2237
    %2646 = vmatpush.bf16.msra.mxu0 %v2233
    %2647 = vmatpush.bf16.msra.mxu0 %v2229
    %2648 = vmatpush.bf16.msra.mxu0 %v2225
    %2649 = vmatpush.bf16.msra.mxu0 %v2221
    %2650 = vmatmul.bf16.gmra.mxu0 %v1692
    %v2651 = vpop.f32.mrf.mxu0
    %v2652 = vadd.f32 %v1829, %v2651
    %v2653 = vpop.f32.mrf.mxu0
    %v2654 = vadd.f32 %v1829, %v2653
    %2655 = vdwg.mxu0
    %2656 = vmatpush.bf16.msra.mxu0 %v2281
    %2657 = vmatpush.bf16.msra.mxu0 %v2277
    %2658 = vmatpush.bf16.msra.mxu0 %v2273
    %2659 = vmatpush.bf16.msra.mxu0 %v2269
    %2660 = vmatpush.bf16.msra.mxu0 %v2265
    %2661 = vmatpush.bf16.msra.mxu0 %v2261
    %2662 = vmatpush.bf16.msra.mxu0 %v2257
    %2663 = vmatpush.bf16.msra.mxu0 %v2253
    %2664 = vmatmul.bf16.gmra.mxu0 %v1693
    %v2665 = vpop.f32.mrf.mxu0
    %v2666 = vadd.f32 %v2652, %v2665
    %v2667 = vpop.f32.mrf.mxu0
    %v2668 = vadd.f32 %v2654, %v2667
    %2669 = vdwg.mxu0
    %2670 = vmatpush.bf16.msra.mxu0 %v2313
    %2671 = vmatpush.bf16.msra.mxu0 %v2309
    %2672 = vmatpush.bf16.msra.mxu0 %v2305
    %2673 = vmatpush.bf16.msra.mxu0 %v2301
    %2674 = vmatpush.bf16.msra.mxu0 %v2297
    %2675 = vmatpush.bf16.msra.mxu0 %v2293
    %2676 = vmatpush.bf16.msra.mxu0 %v2289
    %2677 = vmatpush.bf16.msra.mxu0 %v2285
    %2678 = vmatmul.bf16.gmra.mxu0 %v1694
    %v2679 = vpop.f32.mrf.mxu0
    %v2680 = vadd.f32 %v2666, %v2679
    %v2681 = vpop.f32.mrf.mxu0
    %v2682 = vadd.f32 %v2668, %v2681
    %2683 = vdwg.mxu0
    %2684 = vmatpush.bf16.msra.mxu0 %v2345
    %2685 = vmatpush.bf16.msra.mxu0 %v2341
    %2686 = vmatpush.bf16.msra.mxu0 %v2337
    %2687 = vmatpush.bf16.msra.mxu0 %v2333
    %2688 = vmatpush.bf16.msra.mxu0 %v2329
    %2689 = vmatpush.bf16.msra.mxu0 %v2325
    %2690 = vmatpush.bf16.msra.mxu0 %v2321
    %2691 = vmatpush.bf16.msra.mxu0 %v2317
    %2692 = vmatmul.bf16.gmra.mxu0 %v1695
    %v2693 = vpop.f32.mrf.mxu0
    %v2694 = vadd.f32 %v2680, %v2693
    %v2695 = vpop.f32.mrf.mxu0
    %v2696 = vadd.f32 %v2682, %v2695
    %2697 = vdwg.mxu0
    %v2698 = vmax.f32 %v2526, 0.0
    %v2699 = vmax.f32 %v2582, 0.0
    %v2700 = vmax.f32 %v2638, 0.0
    %v2701 = vmax.f32 %v2694, 0.0
    %v2702 = vmax.f32 %v2528, 0.0
    %v2703 = vmax.f32 %v2584, 0.0
    %v2704 = vmax.f32 %v2640, 0.0
    %v2705 = vmax.f32 %v2696, 0.0
    %v2706 = vpack.c.bf16 %v2702, %v2698
    %v2707 = vpack.c.bf16 %v2703, %v2699
    %v2708 = vpack.c.bf16 %v2704, %v2700
    %v2709 = vpack.c.bf16 %v2705, %v2701
    %v2710 = vld [vmem:[%s5] sm:$0xf]
    %v2711 = vld [vmem:[%s5 + $0x4] sm:$0xf]
    %v2712 = vld [vmem:[%s5 + $0x8] sm:$0xf]
    %v2713 = vld [vmem:[%s5 + $0xc] sm:$0xf]
    %v2714 = vld [vmem:[%s5 + $0x10] sm:$0xf]
    %v2715 = vld [vmem:[%s5 + $0x14] sm:$0xf]
    %v2716 = vld [vmem:[%s5 + $0x18] sm:$0xf]
    %v2717 = vld [vmem:[%s5 + $0x1c] sm:$0xf]
    %v2718 = vld [vmem:[%s5 + $0x20] sm:$0xf]
    %v2719 = vld [vmem:[%s5 + $0x24] sm:$0xf]
    %v2720 = vld [vmem:[%s5 + $0x28] sm:$0xf]
    %v2721 = vld [vmem:[%s5 + $0x2c] sm:$0xf]
    %v2722 = vld [vmem:[%s5 + $0x30] sm:$0xf]
    %v2723 = vld [vmem:[%s5 + $0x34] sm:$0xf]
    %v2724 = vld [vmem:[%s5 + $0x38] sm:$0xf]
    %v2725 = vld [vmem:[%s5 + $0x3c] sm:$0xf]
    %v2726 = vld [vmem:[%s5 + $0x40] sm:$0xf]
    %v2727 = vld [vmem:[%s5 + $0x44] sm:$0xf]
    %v2728 = vld [vmem:[%s5 + $0x48] sm:$0xf]
    %v2729 = vld [vmem:[%s5 + $0x4c] sm:$0xf]
    %v2730 = vld [vmem:[%s5 + $0x50] sm:$0xf]
    %v2731 = vld [vmem:[%s5 + $0x54] sm:$0xf]
    %v2732 = vld [vmem:[%s5 + $0x58] sm:$0xf]
    %v2733 = vld [vmem:[%s5 + $0x5c] sm:$0xf]
    %v2734 = vld [vmem:[%s5 + $0x60] sm:$0xf]
    %v2735 = vld [vmem:[%s5 + $0x64] sm:$0xf]
    %v2736 = vld [vmem:[%s5 + $0x68] sm:$0xf]
    %v2737 = vld [vmem:[%s5 + $0x6c] sm:$0xf]
    %v2738 = vld [vmem:[%s5 + $0x70] sm:$0xf]
    %v2739 = vld [vmem:[%s5 + $0x74] sm:$0xf]
    %v2740 = vld [vmem:[%s5 + $0x78] sm:$0xf]
    %v2741 = vld [vmem:[%s5 + $0x7c] sm:$0xf]
    %v2742 = vld [vmem:[%s5 + $0x80] sm:$0xf]
    %v2743 = vld [vmem:[%s5 + $0x84] sm:$0xf]
    %v2744 = vld [vmem:[%s5 + $0x88] sm:$0xf]
    %v2745 = vld [vmem:[%s5 + $0x8c] sm:$0xf]
    %v2746 = vld [vmem:[%s5 + $0x90] sm:$0xf]
    %v2747 = vld [vmem:[%s5 + $0x94] sm:$0xf]
    %v2748 = vld [vmem:[%s5 + $0x98] sm:$0xf]
    %v2749 = vld [vmem:[%s5 + $0x9c] sm:$0xf]
    %v2750 = vld [vmem:[%s5 + $0xa0] sm:$0xf]
    %v2751 = vld [vmem:[%s5 + $0xa4] sm:$0xf]
    %v2752 = vld [vmem:[%s5 + $0xa8] sm:$0xf]
    %v2753 = vld [vmem:[%s5 + $0xac] sm:$0xf]
    %v2754 = vld [vmem:[%s5 + $0xb0] sm:$0xf]
    %v2755 = vld [vmem:[%s5 + $0xb4] sm:$0xf]
    %v2756 = vld [vmem:[%s5 + $0xb8] sm:$0xf]
    %v2757 = vld [vmem:[%s5 + $0xbc] sm:$0xf]
    %v2758 = vld [vmem:[%s5 + $0xc0] sm:$0xf]
    %v2759 = vld [vmem:[%s5 + $0xc4] sm:$0xf]
    %v2760 = vld [vmem:[%s5 + $0xc8] sm:$0xf]
    %v2761 = vld [vmem:[%s5 + $0xcc] sm:$0xf]
    %v2762 = vld [vmem:[%s5 + $0xd0] sm:$0xf]
    %v2763 = vld [vmem:[%s5 + $0xd4] sm:$0xf]
    %v2764 = vld [vmem:[%s5 + $0xd8] sm:$0xf]
    %v2765 = vld [vmem:[%s5 + $0xdc] sm:$0xf]
    %v2766 = vld [vmem:[%s5 + $0xe0] sm:$0xf]
    %v2767 = vld [vmem:[%s5 + $0xe4] sm:$0xf]
    %v2768 = vld [vmem:[%s5 + $0xe8] sm:$0xf]
    %v2769 = vld [vmem:[%s5 + $0xec] sm:$0xf]
    %v2770 = vld [vmem:[%s5 + $0xf0] sm:$0xf]
    %v2771 = vld [vmem:[%s5 + $0xf4] sm:$0xf]
    %v2772 = vld [vmem:[%s5 + $0xf8] sm:$0xf]
    %v2773 = vld [vmem:[%s5 + $0xfc] sm:$0xf]
    %v2774 = vld [vmem:[%s6] sm:$0x1]
    %v2776 = vperm.slane %v2774, 0
    %v2842 = vunpack.c.l.b16 %v2710
    %v2843 = vunpack.c.l.b16 %v2711
    %v2844 = vunpack.c.l.b16 %v2712
    %v2845 = vunpack.c.l.b16 %v2713
    %v2846 = vunpack.c.l.b16 %v2714
    %v2847 = vunpack.c.l.b16 %v2715
    %v2848 = vunpack.c.l.b16 %v2716
    %v2849 = vunpack.c.l.b16 %v2717
    %v2850 = vunpack.c.l.b16 %v2718
    %v2851 = vunpack.c.l.b16 %v2719
    %v2852 = vunpack.c.l.b16 %v2720
    %v2853 = vunpack.c.l.b16 %v2721
    %v2854 = vunpack.c.l.b16 %v2722
    %v2855 = vunpack.c.l.b16 %v2723
    %v2856 = vunpack.c.l.b16 %v2724
    %v2857 = vunpack.c.l.b16 %v2725
    %v2858 = vunpack.c.l.b16 %v2726
    %v2859 = vunpack.c.l.b16 %v2727
    %v2860 = vunpack.c.l.b16 %v2728
    %v2861 = vunpack.c.l.b16 %v2729
    %v2862 = vunpack.c.l.b16 %v2730
    %v2863 = vunpack.c.l.b16 %v2731
    %v2864 = vunpack.c.l.b16 %v2732
    %v2865 = vunpack.c.l.b16 %v2733
    %v2866 = vunpack.c.l.b16 %v2734
    %v2867 = vunpack.c.l.b16 %v2735
    %v2868 = vunpack.c.l.b16 %v2736
    %v2869 = vunpack.c.l.b16 %v2737
    %v2870 = vunpack.c.l.b16 %v2738
    %v2871 = vunpack.c.l.b16 %v2739
    %v2872 = vunpack.c.l.b16 %v2740
    %v2873 = vunpack.c.l.b16 %v2741
    %v2874 = vunpack.c.l.b16 %v2742
    %v2875 = vunpack.c.l.b16 %v2743
    %v2876 = vunpack.c.l.b16 %v2744
    %v2877 = vunpack.c.l.b16 %v2745
    %v2878 = vunpack.c.l.b16 %v2746
    %v2879 = vunpack.c.l.b16 %v2747
    %v2880 = vunpack.c.l.b16 %v2748
    %v2881 = vunpack.c.l.b16 %v2749
    %v2882 = vunpack.c.l.b16 %v2750
    %v2883 = vunpack.c.l.b16 %v2751
    %v2884 = vunpack.c.l.b16 %v2752
    %v2885 = vunpack.c.l.b16 %v2753
    %v2886 = vunpack.c.l.b16 %v2754
    %v2887 = vunpack.c.l.b16 %v2755
    %v2888 = vunpack.c.l.b16 %v2756
    %v2889 = vunpack.c.l.b16 %v2757
    %v2890 = vunpack.c.l.b16 %v2758
    %v2891 = vunpack.c.l.b16 %v2759
    %v2892 = vunpack.c.l.b16 %v2760
    %v2893 = vunpack.c.l.b16 %v2761
    %v2894 = vunpack.c.l.b16 %v2762
    %v2895 = vunpack.c.l.b16 %v2763
    %v2896 = vunpack.c.l.b16 %v2764
    %v2897 = vunpack.c.l.b16 %v2765
    %v2898 = vunpack.c.l.b16 %v2766
    %v2899 = vunpack.c.l.b16 %v2767
    %v2900 = vunpack.c.l.b16 %v2768
    %v2901 = vunpack.c.l.b16 %v2769
    %v2902 = vunpack.c.l.b16 %v2770
    %v2903 = vunpack.c.l.b16 %v2771
    %v2904 = vunpack.c.l.b16 %v2772
    %v2905 = vunpack.c.l.b16 %v2773
    %v2906 = vpack.c.b16 %v2843, %v2842
    %v2907 = vpack.c.b16 %v2845, %v2844
    %v2908 = vpack.c.b16 %v2847, %v2846
    %v2909 = vpack.c.b16 %v2849, %v2848
    %v2910 = vpack.c.b16 %v2851, %v2850
    %v2911 = vpack.c.b16 %v2853, %v2852
    %v2912 = vpack.c.b16 %v2855, %v2854
    %v2913 = vpack.c.b16 %v2857, %v2856
    %v2914 = vpack.c.b16 %v2859, %v2858
    %v2915 = vpack.c.b16 %v2861, %v2860
    %v2916 = vpack.c.b16 %v2863, %v2862
    %v2917 = vpack.c.b16 %v2865, %v2864
    %v2918 = vpack.c.b16 %v2867, %v2866
    %v2919 = vpack.c.b16 %v2869, %v2868
    %v2920 = vpack.c.b16 %v2871, %v2870
    %v2921 = vpack.c.b16 %v2873, %v2872
    %v2922 = vpack.c.b16 %v2875, %v2874
    %v2923 = vpack.c.b16 %v2877, %v2876
    %v2924 = vpack.c.b16 %v2879, %v2878
    %v2925 = vpack.c.b16 %v2881, %v2880
    %v2926 = vpack.c.b16 %v2883, %v2882
    %v2927 = vpack.c.b16 %v2885, %v2884
    %v2928 = vpack.c.b16 %v2887, %v2886
    %v2929 = vpack.c.b16 %v2889, %v2888
    %v2930 = vpack.c.b16 %v2891, %v2890
    %v2931 = vpack.c.b16 %v2893, %v2892
    %v2932 = vpack.c.b16 %v2895, %v2894
    %v2933 = vpack.c.b16 %v2897, %v2896
    %v2934 = vpack.c.b16 %v2899, %v2898
    %v2935 = vpack.c.b16 %v2901, %v2900
    %v2936 = vpack.c.b16 %v2903, %v2902
    %v2937 = vpack.c.b16 %v2905, %v2904
    %2970 = vmatpush.bf16.msra.mxu0 %v2913
    %2971 = vmatpush.bf16.msra.mxu0 %v2912
    %2972 = vmatpush.bf16.msra.mxu0 %v2911
    %2973 = vmatpush.bf16.msra.mxu0 %v2910
    %2974 = vmatpush.bf16.msra.mxu0 %v2909
    %2975 = vmatpush.bf16.msra.mxu0 %v2908
    %2976 = vmatpush.bf16.msra.mxu0 %v2907
    %2977 = vmatpush.bf16.msra.mxu0 %v2906
    %2978 = vmatmul.bf16.gmra.mxu0 %v2706
    %v2979 = vpop.f32.mrf.mxu0
    %v2980 = vadd.f32 %v2776, %v2979
    %v2981 = vpop.f32.mrf.mxu0
    %v2982 = vadd.f32 %v2776, %v2981
    %2983 = vdwg.mxu0
    %2984 = vmatpush.bf16.msra.mxu0 %v2921
    %2985 = vmatpush.bf16.msra.mxu0 %v2920
    %2986 = vmatpush.bf16.msra.mxu0 %v2919
    %2987 = vmatpush.bf16.msra.mxu0 %v2918
    %2988 = vmatpush.bf16.msra.mxu0 %v2917
    %2989 = vmatpush.bf16.msra.mxu0 %v2916
    %2990 = vmatpush.bf16.msra.mxu0 %v2915
    %2991 = vmatpush.bf16.msra.mxu0 %v2914
    %2992 = vmatmul.bf16.gmra.mxu0 %v2707
    %v2993 = vpop.f32.mrf.mxu0
    %v2994 = vadd.f32 %v2980, %v2993
    %v2995 = vpop.f32.mrf.mxu0
    %v2996 = vadd.f32 %v2982, %v2995
    %2997 = vdwg.mxu0
    %2998 = vmatpush.bf16.msra.mxu0 %v2929
    %2999 = vmatpush.bf16.msra.mxu0 %v2928
    %3000 = vmatpush.bf16.msra.mxu0 %v2927
    %3001 = vmatpush.bf16.msra.mxu0 %v2926
    %3002 = vmatpush.bf16.msra.mxu0 %v2925
    %3003 = vmatpush.bf16.msra.mxu0 %v2924
    %3004 = vmatpush.bf16.msra.mxu0 %v2923
    %3005 = vmatpush.bf16.msra.mxu0 %v2922
    %3006 = vmatmul.bf16.gmra.mxu0 %v2708
    %v3007 = vpop.f32.mrf.mxu0
    %v3008 = vadd.f32 %v2994, %v3007
    %v3009 = vpop.f32.mrf.mxu0
    %v3010 = vadd.f32 %v2996, %v3009
    %3011 = vdwg.mxu0
    %3012 = vmatpush.bf16.msra.mxu0 %v2937
    %3013 = vmatpush.bf16.msra.mxu0 %v2936
    %3014 = vmatpush.bf16.msra.mxu0 %v2935
    %3015 = vmatpush.bf16.msra.mxu0 %v2934
    %3016 = vmatpush.bf16.msra.mxu0 %v2933
    %3017 = vmatpush.bf16.msra.mxu0 %v2932
    %3018 = vmatpush.bf16.msra.mxu0 %v2931
    %3019 = vmatpush.bf16.msra.mxu0 %v2930
    %3020 = vmatmul.bf16.gmra.mxu0 %v2709
    %v3021 = vpop.f32.mrf.mxu0
    %v3022 = vadd.f32 %v3008, %v3021
    %v3023 = vpop.f32.mrf.mxu0
    %v3024 = vadd.f32 %v3010, %v3023
    %3025 = vdwg.mxu0
    %v3026 = vpack.c.bf16 %v3022, %v3022
    %v3027 = vpack.c.bf16 %v3024, %v3024
    %3028 = vst [vmem:[%s7] sm:$0xf] %v3026
    %3029 = vst [vmem:[%s7 + $0x4] sm:$0xf] %v3027
    // Predicated region
    $region38: #{_forward_impl.1} parent=1 // pred_check
      _
    $region39: #{_forward_impl.1} parent=1 // pred_check_branch
      %3031 = sbr.rel (0) target = $region41
    $region40: #{_forward_impl.1} parent=1 // pred_region
      _
    $region41: #{_forward_impl.1} parent=1 // pred_fallthru
      _
    // Predicated region
    $region42: #{_forward_impl.1} parent=1 // pred_check
      _
    $region43: #{_forward_impl.1} parent=1 // pred_check_branch
      %3033 = sbr.rel (0) target = $region45
    $region44: #{_forward_impl.1} parent=1 // pred_region
      _
    $region45: #{_forward_impl.1} parent=1 // pred_fallthru
      _
    %3034 = vsyncpa [#allocation3], 1
    %3035 = vsyncpa [#allocation5], 1

</llo_original>
